<compile_context>
chip_gen: v7x
topology: tpu7x:2x2x1
jax: 0.10.0
libtpu: 0.0.40
codegen_flags: <defaults>
</compile_context>

<pallas_src>
from functools import partial

import jax
import jax.numpy as jnp
from jax.experimental import pallas as pl
from jax.experimental.pallas import tpu as pltpu

NEG_SLOPE = 0.01   # nn.LeakyReLU() default
EPS = 1e-5         # nn.BatchNorm2d default
LANE = 128


# ---------------------------------------------------------------------------
# Kernel 1: per-image direct convolution (VMEM im2col + one MXU matmul,
#           bf16 operands -> f32 accumulation) + per-image partial batch-norm
#           statistics (sum, sum of squares).
# Grid: (N,), fully parallel (no cross-step state).
# ---------------------------------------------------------------------------
def _conv_stats_kernel(x_ref, w_ref, y_ref, stats_ref, *,
                       KH, KW, Ho, Wo, stride, cout, cin):
    hw = Ho * Wo

    # Assemble the (Ho*Wo, KH*KW*Cin) patch matrix in VMEM from statically
    # shifted windows of the padded NHWC input (im2col never touches HBM).
    cols = []
    for kh in range(KH):                      # unrolled at trace time
        for kw in range(KW):
            xs = x_ref[0,
                       kh:kh + stride * (Ho - 1) + 1,
                       kw:kw + stride * (Wo - 1) + 1, :]        # (sHo, sWo, Cin)
            if stride > 1:
                xs = xs[::stride, ::stride, :]                  # (Ho, Wo, Cin)
            cols.append(xs.reshape(hw, cin))                    # row-major reshape
    patch = jnp.concatenate(cols, axis=1) if len(cols) > 1 else cols[0]

    # One deep matmul: (HW, KH*KW*Cin) x (KH*KW*Cin, Coutp) -> f32 (HW, Coutp).
    acc = jnp.dot(patch, w_ref[...], preferred_element_type=jnp.float32)

    # f32 partial statistics for this image (padded lanes >= cout are exactly 0).
    stats_ref[0, 0:1, :] = jnp.sum(acc, axis=0, keepdims=True)
    stats_ref[0, 1:2, :] = jnp.sum(acc * acc, axis=0, keepdims=True)

    # Write y channel-major: (Cout, Ho*Wo) — lane-dense stores along the spatial
    # axis and already in NCHW order (no HBM transpose needed afterwards).
    y_ref[0] = acc.T[:cout, :].astype(y_ref.dtype)


# ---------------------------------------------------------------------------
# Kernel 2: fused batch-norm (per-channel scale/shift) + LeakyReLU.
# Operates on (Cout, Ho*Wo) blocks: lane axis is dense spatial.
# ---------------------------------------------------------------------------
def _bn_lrelu_kernel(y_ref, scale_ref, shift_ref, o_ref, *, slope):
    y = y_ref[0].astype(jnp.float32)                 # (Cout, Ho*Wo)
    y = y * scale_ref[...] + shift_ref[...]          # (Cout, 1) broadcast over lanes
    o_ref[0] = jnp.where(y >= 0, y, slope * y).astype(o_ref.dtype)


def basic_conv_forward(x, weight, gamma, beta, *, stride=1, padding=1,
                       use_bn=True, relu=True):
    """Forward pass of BasicConv (deconv=False, is_3d=False)."""
    N, Cin, H, W = x.shape
    Cout, _, KH, KW = weight.shape
    Ho = (H + 2 * padding - KH) // stride + 1
    Wo = (W + 2 * padding - KW) // stride + 1
    Hp, Wp = H + 2 * padding, W + 2 * padding
    HW = Ho * Wo
    M = N * HW
    K = KH * KW * Cin
    Coutp = ((Cout + LANE - 1) // LANE) * LANE       # lane-dense MXU output

    # --- cheap layout prep (no im2col materialization in HBM) ---------------
    xp = jnp.pad(x, ((0, 0), (0, 0), (padding, padding), (padding, padding)))
    xp = xp.transpose(0, 2, 3, 1).astype(jnp.bfloat16)            # (N, Hp, Wp, Cin)
    w = weight.transpose(2, 3, 1, 0).reshape(K, Cout)             # (KH*KW*Cin, Cout)
    w = jnp.pad(w, ((0, 0), (0, Coutp - Cout))).astype(jnp.bfloat16)

    kern1 = partial(_conv_stats_kernel, KH=KH, KW=KW, Ho=Ho, Wo=Wo,
                    stride=stride, cout=Cout, cin=Cin)
    y, stats = pl.pallas_call(
        kern1,
        grid=(N,),
        in_specs=[pl.BlockSpec((1, Hp, Wp, Cin), lambda n: (n, 0, 0, 0)),
                  pl.BlockSpec((K, Coutp), lambda n: (0, 0))],
        out_specs=(pl.BlockSpec((1, Cout, HW), lambda n: (n, 0, 0)),
                   pl.BlockSpec((1, 2, Coutp), lambda n: (n, 0, 0))),
        out_shape=(jax.ShapeDtypeStruct((N, Cout, HW), jnp.bfloat16),
                   jax.ShapeDtypeStruct((N, 2, Coutp), jnp.float32)),
        compiler_params=pltpu.CompilerParams(dimension_semantics=("parallel",)),
    )(xp, w)

    # --- fold BN (training-mode batch statistics) into per-channel affine ---
    if use_bn:
        s = jnp.sum(stats, axis=0)                               # (2, Coutp)
        mean = s[0, :Cout] / M
        var = jnp.maximum(s[1, :Cout] / M - mean * mean, 0.0)    # clamp cancellation
        scale = gamma.astype(jnp.float32) * jax.lax.rsqrt(var + EPS)
        shift = beta.astype(jnp.float32) - mean * scale
    else:
        scale = jnp.ones((Cout,), jnp.float32)
        shift = jnp.zeros((Cout,), jnp.float32)
    slope = NEG_SLOPE if relu else 1.0                           # 1.0 -> identity

    out = pl.pallas_call(
        partial(_bn_lrelu_kernel, slope=slope),
        grid=(N,),
        in_specs=[pl.BlockSpec((1, Cout, HW), lambda n: (n, 0, 0)),
                  pl.BlockSpec((Cout, 1), lambda n: (0, 0)),
                  pl.BlockSpec((Cout, 1), lambda n: (0, 0))],
        out_specs=pl.BlockSpec((1, Cout, HW), lambda n: (n, 0, 0)),
        out_shape=jax.ShapeDtypeStruct((N, Cout, HW), x.dtype),
        compiler_params=pltpu.CompilerParams(dimension_semantics=("parallel",)),
    )(y, scale.reshape(Cout, 1), shift.reshape(Cout, 1))

    # (N, Cout, Ho*Wo) -> (N, Cout, Ho, Wo) is a free, contiguous reshape (NCHW).
    return out.reshape(N, Cout, Ho, Wo)


# ---------------------------------------------------------------------------
# Pure-JAX f32 reference (mirrors the PyTorch forward).
# ---------------------------------------------------------------------------
def reference_forward(x, weight, gamma, beta, *, stride=1, padding=1):
    y = jax.lax.conv_general_dilated(
        x.astype(jnp.float32), weight.astype(jnp.float32),
        window_strides=(stride, stride),
        padding=((padding, padding), (padding, padding)),
        dimension_numbers=("NCHW", "OIHW", "NCHW"))
    mean = y.mean(axis=(0, 2, 3), keepdims=True)
    var = y.var(axis=(0, 2, 3), keepdims=True)   # biased var, like PyTorch BN fwd
    yh = (y - mean) / jnp.sqrt(var + EPS)
    yh = yh * gamma.reshape(1, -1, 1, 1) + beta.reshape(1, -1, 1, 1)
    return jnp.where(yh >= 0, yh, NEG_SLOPE * yh)


if __name__ == "__main__":
    # BasicConv(in_channels=4, out_channels=8, kernel_size=3, stride=1, padding=1)
    N, Cin, H, W = 2, 4, 16, 16
    Cout, KH, KW = 8, 3, 3

    key = jax.random.PRNGKey(0)
    kx, kw, kg, kb = jax.random.split(key, 4)
    x = jax.random.normal(kx, (N, Cin, H, W), dtype=jnp.float32)
    weight = 0.1 * jax.random.normal(kw, (Cout, Cin, KH, KW), dtype=jnp.float32)
    gamma = 0.5 + jax.random.uniform(kg, (Cout,), dtype=jnp.float32)
    beta = 0.1 * jax.random.normal(kb, (Cout,), dtype=jnp.float32)

    fwd = jax.jit(partial(basic_conv_forward, stride=1, padding=1))
    out = jax.block_until_ready(fwd(x, weight, gamma, beta))

    ref = reference_forward(x, weight, gamma, beta, stride=1, padding=1)
    assert out.shape == (N, Cout, H, W)
    # Tolerance accounts for bf16 MXU operands and the bf16 intermediate activation
    # (f32 accumulation & f32 BN statistics); errors are well inside 2e-2.
    assert jnp.allclose(out, ref, rtol=2e-2, atol=2e-2), "mismatch vs reference"

    print("KERNEL_OK")
</pallas_src>

<mosaic_0001>
module attributes {stable_mosaic.version = 11 : i64} {
  func.func @_bn_lrelu_kernel(%arg0: i32, %arg1: memref<1x8x256xbf16, #tpu.memory_space<vmem>>, %arg2: memref<8x1xf32, #tpu.memory_space<vmem>>, %arg3: memref<8x1xf32, #tpu.memory_space<vmem>>, %arg4: memref<1x8x256xf32, #tpu.memory_space<vmem>>) attributes {dimension_semantics = [#tpu.dimension_semantics<parallel>], iteration_bounds = array<i64: 2>, scalar_prefetch = 0 : i64, scratch_operands = 0 : i64, tpu.core_type = #tpu.core_type<tc>, window_params = [{transform_indices = @transform_0, window_bounds = array<i64: 1, 8, 256>}, {pipeline_mode = #tpu.pipeline_mode<synchronous>, transform_indices = @transform_1, window_bounds = array<i64: 8, 1>}, {pipeline_mode = #tpu.pipeline_mode<synchronous>, transform_indices = @transform_2, window_bounds = array<i64: 8, 1>}, {transform_indices = @transform_3, window_bounds = array<i64: 1, 8, 256>}]} {
    %c0 = arith.constant 0 : index
    %c0_0 = arith.constant 0 : index
    %c0_1 = arith.constant 0 : index
    %0 = vector.load %arg1[%c0, %c0_0, %c0_1] : memref<1x8x256xbf16, #tpu.memory_space<vmem>>, vector<1x8x256xbf16>
    %1 = vector.shape_cast %0 : vector<1x8x256xbf16> to vector<8x256xbf16>
    %2 = arith.extf %1 : vector<8x256xbf16> to vector<8x256xf32>
    %c0_2 = arith.constant 0 : index
    %c0_3 = arith.constant 0 : index
    %3 = vector.load %arg2[%c0_2, %c0_3] : memref<8x1xf32, #tpu.memory_space<vmem>>, vector<8x1xf32>
    %4 = vector.broadcast %3 : vector<8x1xf32> to vector<8x256xf32>
    %5 = arith.mulf %2, %4 : vector<8x256xf32>
    %c0_4 = arith.constant 0 : index
    %c0_5 = arith.constant 0 : index
    %6 = vector.load %arg3[%c0_4, %c0_5] : memref<8x1xf32, #tpu.memory_space<vmem>>, vector<8x1xf32>
    %7 = vector.broadcast %6 : vector<8x1xf32> to vector<8x256xf32>
    %8 = arith.addf %5, %7 : vector<8x256xf32>
    %cst = arith.constant 0.000000e+00 : f32
    %9 = vector.broadcast %cst : f32 to vector<8x256xf32>
    %10 = arith.cmpf oge, %8, %9 : vector<8x256xf32>
    %cst_6 = arith.constant 0.00999999977 : f32
    %11 = vector.broadcast %cst_6 : f32 to vector<8x256xf32>
    %12 = arith.mulf %11, %8 : vector<8x256xf32>
    %13 = arith.select %10, %8, %12 : vector<8x256xi1>, vector<8x256xf32>
    %c0_7 = arith.constant 0 : index
    %c0_8 = arith.constant 0 : index
    %c0_9 = arith.constant 0 : index
    %14 = vector.load %arg4[%c0_7, %c0_8, %c0_9] : memref<1x8x256xf32, #tpu.memory_space<vmem>>, vector<1x8x256xf32>
    %15 = vector.shape_cast %14 : vector<1x8x256xf32> to vector<8x256xf32>
    %16 = vector.shape_cast %13 : vector<8x256xf32> to vector<1x8x256xf32>
    tpu.vector_store %arg4[%c0_7, %c0_8, %c0_9], %16 {strides = array<i32>} : memref<1x8x256xf32, #tpu.memory_space<vmem>>, vector<1x8x256xf32>,
    return
  }
  func.func @transform_0(%arg0: i32) -> (i32, i32, i32) {
    %c0_i32 = arith.constant 0 : i32
    %c0_i32_0 = arith.constant 0 : i32
    %c0_i32_1 = arith.constant 0 : i32
    return %arg0, %c0_i32, %c0_i32_0 : i32, i32, i32
  }
  func.func @transform_1(%arg0: i32) -> (i32, i32) {
    %c0_i32 = arith.constant 0 : i32
    %c0_i32_0 = arith.constant 0 : i32
    %c0_i32_1 = arith.constant 0 : i32
    return %c0_i32, %c0_i32_0 : i32, i32
  }
  func.func @transform_2(%arg0: i32) -> (i32, i32) {
    %c0_i32 = arith.constant 0 : i32
    %c0_i32_0 = arith.constant 0 : i32
    %c0_i32_1 = arith.constant 0 : i32
    return %c0_i32, %c0_i32_0 : i32, i32
  }
  func.func @transform_3(%arg0: i32) -> (i32, i32, i32) {
    %c0_i32 = arith.constant 0 : i32
    %c0_i32_0 = arith.constant 0 : i32
    %c0_i32_1 = arith.constant 0 : i32
    return %arg0, %c0_i32, %c0_i32_0 : i32, i32, i32
  }
}

module attributes {stable_mosaic.version = 11 : i64} {
  func.func @_conv_stats_kernel(%arg0: i32, %arg1: memref<1x18x18x4xbf16, #tpu.memory_space<vmem>>, %arg2: memref<36x128xbf16, #tpu.memory_space<vmem>>, %arg3: memref<1x8x256xbf16, #tpu.memory_space<vmem>>, %arg4: memref<1x2x128xf32, #tpu.memory_space<vmem>>) attributes {dimension_semantics = [#tpu.dimension_semantics<parallel>], iteration_bounds = array<i64: 2>, scalar_prefetch = 0 : i64, scratch_operands = 0 : i64, tpu.core_type = #tpu.core_type<tc>, window_params = [{transform_indices = @transform_0, window_bounds = array<i64: 1, 18, 18, 4>}, {pipeline_mode = #tpu.pipeline_mode<synchronous>, transform_indices = @transform_1, window_bounds = array<i64: 36, 128>}, {transform_indices = @transform_2, window_bounds = array<i64: 1, 8, 256>}, {transform_indices = @transform_3, window_bounds = array<i64: 1, 2, 128>}]} {
    %c0 = arith.constant 0 : index
    %c0_0 = arith.constant 0 : index
    %c0_1 = arith.constant 0 : index
    %c0_2 = arith.constant 0 : index
    %0 = vector.load %arg1[%c0, %c0_0, %c0_1, %c0_2] : memref<1x18x18x4xbf16, #tpu.memory_space<vmem>>, vector<1x16x16x4xbf16>
    %1 = vector.shape_cast %0 : vector<1x16x16x4xbf16> to vector<16x16x4xbf16>
    %2 = vector.shape_cast %1 : vector<16x16x4xbf16> to vector<256x4xbf16>
    %c0_3 = arith.constant 0 : index
    %c0_4 = arith.constant 0 : index
    %c1 = arith.constant 1 : index
    %c0_5 = arith.constant 0 : index
    %3 = vector.load %arg1[%c0_3, %c0_4, %c1, %c0_5] : memref<1x18x18x4xbf16, #tpu.memory_space<vmem>>, vector<1x16x16x4xbf16>
    %4 = vector.shape_cast %3 : vector<1x16x16x4xbf16> to vector<16x16x4xbf16>
    %5 = vector.shape_cast %4 : vector<16x16x4xbf16> to vector<256x4xbf16>
    %c0_6 = arith.constant 0 : index
    %c0_7 = arith.constant 0 : index
    %c2 = arith.constant 2 : index
    %c0_8 = arith.constant 0 : index
    %6 = vector.load %arg1[%c0_6, %c0_7, %c2, %c0_8] : memref<1x18x18x4xbf16, #tpu.memory_space<vmem>>, vector<1x16x16x4xbf16>
    %7 = vector.shape_cast %6 : vector<1x16x16x4xbf16> to vector<16x16x4xbf16>
    %8 = vector.shape_cast %7 : vector<16x16x4xbf16> to vector<256x4xbf16>
    %c0_9 = arith.constant 0 : index
    %c1_10 = arith.constant 1 : index
    %c0_11 = arith.constant 0 : index
    %c0_12 = arith.constant 0 : index
    %9 = vector.load %arg1[%c0_9, %c1_10, %c0_11, %c0_12] : memref<1x18x18x4xbf16, #tpu.memory_space<vmem>>, vector<1x16x16x4xbf16>
    %10 = vector.shape_cast %9 : vector<1x16x16x4xbf16> to vector<16x16x4xbf16>
    %11 = vector.shape_cast %10 : vector<16x16x4xbf16> to vector<256x4xbf16>
    %c0_13 = arith.constant 0 : index
    %c1_14 = arith.constant 1 : index
    %c1_15 = arith.constant 1 : index
    %c0_16 = arith.constant 0 : index
    %12 = vector.load %arg1[%c0_13, %c1_14, %c1_15, %c0_16] : memref<1x18x18x4xbf16, #tpu.memory_space<vmem>>, vector<1x16x16x4xbf16>
    %13 = vector.shape_cast %12 : vector<1x16x16x4xbf16> to vector<16x16x4xbf16>
    %14 = vector.shape_cast %13 : vector<16x16x4xbf16> to vector<256x4xbf16>
    %c0_17 = arith.constant 0 : index
    %c1_18 = arith.constant 1 : index
    %c2_19 = arith.constant 2 : index
    %c0_20 = arith.constant 0 : index
    %15 = vector.load %arg1[%c0_17, %c1_18, %c2_19, %c0_20] : memref<1x18x18x4xbf16, #tpu.memory_space<vmem>>, vector<1x16x16x4xbf16>
    %16 = vector.shape_cast %15 : vector<1x16x16x4xbf16> to vector<16x16x4xbf16>
    %17 = vector.shape_cast %16 : vector<16x16x4xbf16> to vector<256x4xbf16>
    %c0_21 = arith.constant 0 : index
    %c2_22 = arith.constant 2 : index
    %c0_23 = arith.constant 0 : index
    %c0_24 = arith.constant 0 : index
    %18 = vector.load %arg1[%c0_21, %c2_22, %c0_23, %c0_24] : memref<1x18x18x4xbf16, #tpu.memory_space<vmem>>, vector<1x16x16x4xbf16>
    %19 = vector.shape_cast %18 : vector<1x16x16x4xbf16> to vector<16x16x4xbf16>
    %20 = vector.shape_cast %19 : vector<16x16x4xbf16> to vector<256x4xbf16>
    %c0_25 = arith.constant 0 : index
    %c2_26 = arith.constant 2 : index
    %c1_27 = arith.constant 1 : index
    %c0_28 = arith.constant 0 : index
    %21 = vector.load %arg1[%c0_25, %c2_26, %c1_27, %c0_28] : memref<1x18x18x4xbf16, #tpu.memory_space<vmem>>, vector<1x16x16x4xbf16>
    %22 = vector.shape_cast %21 : vector<1x16x16x4xbf16> to vector<16x16x4xbf16>
    %23 = vector.shape_cast %22 : vector<16x16x4xbf16> to vector<256x4xbf16>
    %c0_29 = arith.constant 0 : index
    %c2_30 = arith.constant 2 : index
    %c2_31 = arith.constant 2 : index
    %c0_32 = arith.constant 0 : index
    %24 = vector.load %arg1[%c0_29, %c2_30, %c2_31, %c0_32] : memref<1x18x18x4xbf16, #tpu.memory_space<vmem>>, vector<1x16x16x4xbf16>
    %25 = vector.shape_cast %24 : vector<1x16x16x4xbf16> to vector<16x16x4xbf16>
    %26 = vector.shape_cast %25 : vector<16x16x4xbf16> to vector<256x4xbf16>
    %27 = tpu.concatenate %2, %5, %8, %11, %14, %17, %20, %23, %26 in 1 : vector<256x4xbf16>, vector<256x4xbf16>, vector<256x4xbf16>, vector<256x4xbf16>, vector<256x4xbf16>, vector<256x4xbf16>, vector<256x4xbf16>, vector<256x4xbf16>, vector<256x4xbf16> -> vector<256x36xbf16>
    %c0_33 = arith.constant 0 : index
    %c0_34 = arith.constant 0 : index
    %28 = vector.load %arg2[%c0_33, %c0_34] : memref<36x128xbf16, #tpu.memory_space<vmem>>, vector<36x128xbf16>
    %cst = arith.constant dense<0.000000e+00> : vector<256x128xf32>
    %29 = tpu.matmul %27, %28, %cst {dimension_numbers = #tpu.dot_dimension_numbers<[1], [0], [0], [1], [0, 0, 1, 1], [], []>} : vector<256x36xbf16>, vector<36x128xbf16>, vector<256x128xf32> -> vector<256x128xf32>
    %cst_35 = arith.constant dense<0.000000e+00> : vector<128xf32>
    %30 = vector.multi_reduction <add>, %29, %cst_35 [0] : vector<256x128xf32> to vector<128xf32>
    %31 = vector.shape_cast %30 : vector<128xf32> to vector<1x128xf32>
    %c0_36 = arith.constant 0 : index
    %c0_37 = arith.constant 0 : index
    %c0_38 = arith.constant 0 : index
    %32 = vector.load %arg4[%c0_36, %c0_37, %c0_38] : memref<1x2x128xf32, #tpu.memory_space<vmem>>, vector<1x1x128xf32>
    %33 = vector.shape_cast %32 : vector<1x1x128xf32> to vector<1x128xf32>
    %34 = vector.shape_cast %31 : vector<1x128xf32> to vector<1x1x128xf32>
    tpu.vector_store %arg4[%c0_36, %c0_37, %c0_38], %34 {strides = array<i32>} : memref<1x2x128xf32, #tpu.memory_space<vmem>>, vector<1x1x128xf32>,
    %35 = arith.mulf %29, %29 : vector<256x128xf32>
    %cst_39 = arith.constant dense<0.000000e+00> : vector<128xf32>
    %36 = vector.multi_reduction <add>, %35, %cst_39 [0] : vector<256x128xf32> to vector<128xf32>
    %37 = vector.shape_cast %36 : vector<128xf32> to vector<1x128xf32>
    %c0_40 = arith.constant 0 : index
    %c1_41 = arith.constant 1 : index
    %c0_42 = arith.constant 0 : index
    %38 = vector.load %arg4[%c0_40, %c1_41, %c0_42] : memref<1x2x128xf32, #tpu.memory_space<vmem>>, vector<1x1x128xf32>
    %39 = vector.shape_cast %38 : vector<1x1x128xf32> to vector<1x128xf32>
    %40 = vector.shape_cast %37 : vector<1x128xf32> to vector<1x1x128xf32>
    tpu.vector_store %arg4[%c0_40, %c1_41, %c0_42], %40 {strides = array<i32>} : memref<1x2x128xf32, #tpu.memory_space<vmem>>, vector<1x1x128xf32>,
    %41 = tpu.transpose %29, [1, 0] : vector<256x128xf32> -> vector<128x256xf32>
    %42 = vector.extract_strided_slice %41 {offsets = [0, 0], sizes = [8, 256], strides = [1, 1]} : vector<128x256xf32> to vector<8x256xf32>
    %43 = arith.truncf %42 : vector<8x256xf32> to vector<8x256xbf16>
    %c0_43 = arith.constant 0 : index
    %c0_44 = arith.constant 0 : index
    %c0_45 = arith.constant 0 : index
    %44 = vector.load %arg3[%c0_43, %c0_44, %c0_45] : memref<1x8x256xbf16, #tpu.memory_space<vmem>>, vector<1x8x256xbf16>
    %45 = vector.shape_cast %44 : vector<1x8x256xbf16> to vector<8x256xbf16>
    %46 = vector.shape_cast %43 : vector<8x256xbf16> to vector<1x8x256xbf16>
    tpu.vector_store %arg3[%c0_43, %c0_44, %c0_45], %46 {strides = array<i32>} : memref<1x8x256xbf16, #tpu.memory_space<vmem>>, vector<1x8x256xbf16>,
    return
  }
  func.func @transform_0(%arg0: i32) -> (i32, i32, i32, i32) {
    %c0_i32 = arith.constant 0 : i32
    %c0_i32_0 = arith.constant 0 : i32
    %c0_i32_1 = arith.constant 0 : i32
    %c0_i32_2 = arith.constant 0 : i32
    return %arg0, %c0_i32, %c0_i32_0, %c0_i32_1 : i32, i32, i32, i32
  }
  func.func @transform_1(%arg0: i32) -> (i32, i32) {
    %c0_i32 = arith.constant 0 : i32
    %c0_i32_0 = arith.constant 0 : i32
    %c0_i32_1 = arith.constant 0 : i32
    return %c0_i32, %c0_i32_0 : i32, i32
  }
  func.func @transform_2(%arg0: i32) -> (i32, i32, i32) {
    %c0_i32 = arith.constant 0 : i32
    %c0_i32_0 = arith.constant 0 : i32
    %c0_i32_1 = arith.constant 0 : i32
    return %arg0, %c0_i32, %c0_i32_0 : i32, i32, i32
  }
  func.func @transform_3(%arg0: i32) -> (i32, i32, i32) {
    %c0_i32 = arith.constant 0 : i32
    %c0_i32_0 = arith.constant 0 : i32
    %c0_i32_1 = arith.constant 0 : i32
    return %arg0, %c0_i32, %c0_i32_0 : i32, i32, i32
  }
}

</mosaic_0001>

<llo_original>
// kernel: basic_conv_forward.3
$region0: #{basic_conv_forward.3}
  #allocation0 [shape = 'u32[]', space=smem, size = 0x4, offset = 0x4, fixed_abs, tag = 'smem constant byte address 0x4 - core index']
  #allocation1 [shape = 'u32[144,128]{1,0:T(1,128)}', space=vmem, size = 0x12000, scoped, tag = 'internal scratch']
  %s0 = inlined_call_operand.vmem [shape: bf16[2,8,256], index: 0, kind: input, shape index: {}]
  %s1 = inlined_call_operand.vmem [shape: f32[8,1], index: 1, kind: input, shape index: {}]
  %s2 = inlined_call_operand.vmem [shape: f32[8,1], index: 2, kind: input, shape index: {}]
  %s3 = inlined_call_operand.vmem [shape: f32[2,8,256], index: 3, kind: output, shape index: {}]
  %s4 = sld [smem:[#allocation0]]
  $region45: #{basic_conv_forward.3} parent=0
    _
  %s6 = ssub.s32 1, %s4
  %s7 = scalar_select 0, %s6, %s4
  loop: start=0, step=1, limit=4
  $region2: #{basic_conv_forward.3} parent=0 // loop_pre_header
    _
  $region3: #{basic_conv_forward.3} parent=0 // loop_header
    %s9 = sphi 0, %s13
    %p10 = scmp.ge.s32.totalorder %s9, 4
    %s19 = sphi 0, %s21
    %s22 = sphi 0, %s19
    %s23 = sphi 0, %s22
    %s39 = sphi 0, %s23
    %s43 = sphi 0, %s43
    %s45 = sphi 0, %s43
    %s46 = sphi 0, %s45
    %s60 = sphi 0, %s46
    %s64 = sphi 0, %s64
    %s66 = sphi 0, %s64
    %s67 = sphi 0, %s66
    %s81 = sphi 0, %s67
    %s87 = sphi 0, %s89
    %s90 = sphi 0, %s87
    %s91 = sphi 0, %s90
    %s107 = sphi 0, %s91
  $region4: #{basic_conv_forward.3} parent=0 // loop_header_branch
    %12 = sbr.rel (%p10) target = $region8
  $region5: #{basic_conv_forward.3} parent=0 // loop_body
    %s14 = ssub.s32 %s9, 1
    %s15 = ssub.s32 %s9, 2
    %s16 = sadd.s32 %s9, 1
    %s17 = ssub.s32 %s9, %s16
    %p18 = scmp.eq.s32.totalorder %s17, 0
    %s20 = sadd.s32 %s19, 1
    %s21 = scalar_select %p18, %s19, %s20
    %p24 = pneg %p18
    %p25 = scmp.eq.s32.totalorder %s9, 1
    %p26 = por %p24, %p25
    %p27 = scmp.ne.s32.totalorder %s19, %s22
    %p28 = scmp.eq.s32.totalorder %s9, 0
    %p29 = por %p27, %p28
    %p30 = scmp.ne.s32.totalorder %s19, %s22
    %p31 = scmp.eq.s32.totalorder %s14, 1
    %p32 = por %p30, %p31
    %p33 = scmp.ne.s32.totalorder %s22, %s23
    %p34 = scmp.eq.s32.totalorder %s14, 0
    %p35 = por %p33, %p34
    %p36 = scmp.ne.s32.totalorder %s22, %s23
    %p37 = scmp.eq.s32.totalorder %s15, 1
    %p38 = por %p36, %p37
    %p40 = scmp.ne.s32.totalorder %s23, %s39
    %p41 = scmp.eq.s32.totalorder %s15, 0
    %p42 = por %p40, %p41
    %s44 = sadd.s32 %s43, 1
    %p47 = scmp.eq.s32.totalorder %s9, 1
    %p48 = scmp.ne.s32.totalorder %s43, %s45
    %p49 = scmp.eq.s32.totalorder %s9, 0
    %p50 = por %p48, %p49
    %p51 = scmp.ne.s32.totalorder %s43, %s45
    %p52 = scmp.eq.s32.totalorder %s14, 1
    %p53 = por %p51, %p52
    %p54 = scmp.ne.s32.totalorder %s45, %s46
    %p55 = scmp.eq.s32.totalorder %s14, 0
    %p56 = por %p54, %p55
    %p57 = scmp.ne.s32.totalorder %s45, %s46
    %p58 = scmp.eq.s32.totalorder %s15, 1
    %p59 = por %p57, %p58
    %p61 = scmp.ne.s32.totalorder %s46, %s60
    %p62 = scmp.eq.s32.totalorder %s15, 0
    %p63 = por %p61, %p62
    %s65 = sadd.s32 %s64, 1
    %p68 = scmp.eq.s32.totalorder %s9, 1
    %p69 = scmp.ne.s32.totalorder %s64, %s66
    %p70 = scmp.eq.s32.totalorder %s9, 0
    %p71 = por %p69, %p70
    %p72 = scmp.ne.s32.totalorder %s64, %s66
    %p73 = scmp.eq.s32.totalorder %s14, 1
    %p74 = por %p72, %p73
    %p75 = scmp.ne.s32.totalorder %s66, %s67
    %p76 = scmp.eq.s32.totalorder %s14, 0
    %p77 = por %p75, %p76
    %p78 = scmp.ne.s32.totalorder %s66, %s67
    %p79 = scmp.eq.s32.totalorder %s15, 1
    %p80 = por %p78, %p79
    %p82 = scmp.ne.s32.totalorder %s67, %s81
    %p83 = scmp.eq.s32.totalorder %s15, 0
    %p84 = por %p82, %p83
    %s85 = ssub.s32 %s9, %s16
    %p86 = scmp.eq.s32.totalorder %s85, 0
    %s88 = sadd.s32 %s87, 1
    %s89 = scalar_select %p86, %s87, %s88
    %p92 = pneg %p86
    %p93 = scmp.eq.s32.totalorder %s9, 1
    %p94 = por %p92, %p93
    %p95 = scmp.ne.s32.totalorder %s87, %s90
    %p96 = scmp.eq.s32.totalorder %s9, 0
    %p97 = por %p95, %p96
    %p98 = scmp.ne.s32.totalorder %s87, %s90
    %p99 = scmp.eq.s32.totalorder %s14, 1
    %p100 = por %p98, %p99
    %p101 = scmp.ne.s32.totalorder %s90, %s91
    %p102 = scmp.eq.s32.totalorder %s14, 0
    %p103 = por %p101, %p102
    %p104 = scmp.ne.s32.totalorder %s90, %s91
    %p105 = scmp.eq.s32.totalorder %s15, 1
    %p106 = por %p104, %p105
    %p108 = scmp.ne.s32.totalorder %s91, %s107
    %p109 = scmp.eq.s32.totalorder %s15, 0
    %p110 = por %p108, %p109
    %p111 = scmp.le.s32.totalorder 1, %s9
    %p112 = scmp.lt.s32.totalorder %s9, 3
    %p113 = pnand %p111, %p112
    %p114 = pneg %p113
    // Predicated region
    $region9: #{basic_conv_forward.3} parent=5 // pred_check
      _
    $region10: #{basic_conv_forward.3} parent=5 // pred_check_branch
      %116 = sbr.rel (%p113) target = $region12
    $region11: #{basic_conv_forward.3} parent=5 // pred_region
      %s117 = ssub.s32 %s9, 1
      // Predicated region
      $region13: #{basic_conv_forward.3} parent=11 // pred_check
        %p118 = pneg %p56
      $region14: #{basic_conv_forward.3} parent=11 // pred_check_branch
        %120 = sbr.rel (%p118) target = $region16
      $region15: #{basic_conv_forward.3} parent=11 // pred_region
        _
      $region16: #{basic_conv_forward.3} parent=11 // pred_fallthru
        _
      // Predicated region
      $region17: #{basic_conv_forward.3} parent=11 // pred_check
        %p121 = pneg %p77
      $region18: #{basic_conv_forward.3} parent=11 // pred_check_branch
        %123 = sbr.rel (%p121) target = $region20
      $region19: #{basic_conv_forward.3} parent=11 // pred_region
        _
      $region20: #{basic_conv_forward.3} parent=11 // pred_fallthru
        _
    $region12: #{basic_conv_forward.3} parent=5 // pred_fallthru
      _
    %p124 = scmp.lt.s32.totalorder %s9, 2
    // Predicated region
    $region21: #{basic_conv_forward.3} parent=5 // pred_check
      %p125 = pneg %p124
    $region22: #{basic_conv_forward.3} parent=5 // pred_check_branch
      %127 = sbr.rel (%p125) target = $region24
    $region23: #{basic_conv_forward.3} parent=5 // pred_region
      // Predicated region
      $region25: #{basic_conv_forward.3} parent=23 // pred_check
        %p128 = pneg %p29
      $region26: #{basic_conv_forward.3} parent=23 // pred_check_branch
        %130 = sbr.rel (%p128) target = $region28
      $region27: #{basic_conv_forward.3} parent=23 // pred_region
        %p131 = scmp.lt.s32.totalorder %s9, 1
        %s132 = scalar_select %p131, %s9, 1
        %s133 = smul.addr %s132, 2
        %s134 = smul.addr %s133, 4
        %s135 = scalar_lea.vmem %s0, %s134
      $region28: #{basic_conv_forward.3} parent=23 // pred_fallthru
        _
    $region24: #{basic_conv_forward.3} parent=5 // pred_fallthru
      _
    %p136 = scmp.le.s32.totalorder 1, %s9
    %p137 = scmp.lt.s32.totalorder %s9, 3
    %p138 = pnand %p136, %p137
    %p139 = pneg %p138
    // Predicated region
    $region29: #{basic_conv_forward.3} parent=5 // pred_check
      _
    $region30: #{basic_conv_forward.3} parent=5 // pred_check_branch
      %141 = sbr.rel (%p138) target = $region32
    $region31: #{basic_conv_forward.3} parent=5 // pred_region
      %s142 = ssub.s32 %s9, 1
      %p143 = scmp.lt.s32.totalorder %s14, 1
      %s144 = scalar_select %p143, %s14, 1
      %s145 = smul.addr %s144, 2
      %s146 = smul.addr %s145, 4
      %s147 = scalar_lea.vmem %s0, %s146
      %p148 = pneg %p35
      %p149 = pneg %p32
      %p150 = pneg %p56
      %p151 = pneg %p53
      %p152 = pneg %p77
      %p153 = pneg %p74
      %p154 = pneg %p103
      %p155 = pneg %p100
      %p156 = scmp.lt.s32.totalorder %s14, 1
      %s157 = scalar_select %p156, %s14, 1
      %s158 = smul.addr %s157, 2
      %s159 = smul.addr %s158, 8
      %s160 = scalar_lea.vmem %s3, %s159
      %p161 = scmp.lt.s32.totalorder %s14, 1
      %s162 = scalar_select %p161, %s14, 1
      %s163 = smul.addr %s162, 2
      %s164 = smul.addr %s163, 4
      %s165 = scalar_lea.vmem %s0, %s164
      %p166 = scmp.lt.s32.totalorder %s14, 1
      %s167 = scalar_select %p166, %s14, 1
      %s168 = smul.addr %s167, 2
      %s169 = smul.addr %s168, 8
      %s170 = scalar_lea.vmem %s3, %s169
      %v171 = vld [vmem:[%s165] sm:$0xff]
      %v172 = vunpack.c.l.bf16 %v171
      %v173 = vunpack.c.h.bf16 %v171
      %v174 = vld [vmem:[%s1] sm:$0xff]
      %176 = vset.pattern.permute.xlu0 0
      %177 = vperm.xlu0 %176, %v174
      %v178 = vpop.permute.xlu0 %177
      %v180 = vmul.f32 %v172, %v178
      %v181 = vmul.f32 %v173, %v178
      %v182 = vld [vmem:[%s2] sm:$0xff]
      %184 = vset.pattern.permute.xlu0 0
      %185 = vperm.xlu0 %184, %v182
      %v186 = vpop.permute.xlu0 %185
      %v188 = vadd.f32 %v180, %v186
      %v189 = vadd.f32 %v181, %v186
      %vm190 = vcmp.ge.f32.partialorder %v188, 0.0
      %vm191 = vcmp.ge.f32.partialorder %v189, 0.0
      %v192 = vmul.f32 %v188, 0.01
      %v193 = vmul.f32 %v189, 0.01
      %v194 = vsel %vm190, %v188, %v192
      %v195 = vsel %vm191, %v189, %v193
      %196 = vst [vmem:[%s170] sm:$0xff] %v194
      %197 = vst [vmem:[%s170 + $0x8] sm:$0xff] %v195
      %p198 = scmp.lt.s32.totalorder %s14, 1
      %s199 = scalar_select %p198, %s14, 1
      %s200 = smul.addr %s199, 2
      %s201 = smul.addr %s200, 8
      %s202 = scalar_lea.vmem %s3, %s201
      // Predicated region
      $region33: #{basic_conv_forward.3} parent=31 // pred_check
        %p203 = pneg %p100
      $region34: #{basic_conv_forward.3} parent=31 // pred_check_branch
        %205 = sbr.rel (%p203) target = $region36
      $region35: #{basic_conv_forward.3} parent=31 // pred_region
        _
      $region36: #{basic_conv_forward.3} parent=31 // pred_fallthru
        _
    $region32: #{basic_conv_forward.3} parent=5 // pred_fallthru
      _
    %p206 = scmp.le.s32.totalorder 2, %s9
    // Predicated region
    $region37: #{basic_conv_forward.3} parent=5 // pred_check
      %p207 = pneg %p206
    $region38: #{basic_conv_forward.3} parent=5 // pred_check_branch
      %209 = sbr.rel (%p207) target = $region40
    $region39: #{basic_conv_forward.3} parent=5 // pred_region
      %s210 = ssub.s32 %s9, 2
      // Predicated region
      $region41: #{basic_conv_forward.3} parent=39 // pred_check
        %p211 = pneg %p106
      $region42: #{basic_conv_forward.3} parent=39 // pred_check_branch
        %213 = sbr.rel (%p211) target = $region44
      $region43: #{basic_conv_forward.3} parent=39 // pred_region
        %p214 = scmp.lt.s32.totalorder %s15, 1
        %s215 = scalar_select %p214, %s15, 1
        %s216 = smul.addr %s215, 2
        %s217 = smul.addr %s216, 8
        %s218 = scalar_lea.vmem %s3, %s217
      $region44: #{basic_conv_forward.3} parent=39 // pred_fallthru
        _
    $region40: #{basic_conv_forward.3} parent=5 // pred_fallthru
      _
  $region6: #{basic_conv_forward.3} parent=0 // loop_footer
    %s13 = sadd.s32 1, %s9
  $region7: #{basic_conv_forward.3} parent=0 // loop_footer_branch
    %8 = sbr.rel target = $region3
  $region8: #{basic_conv_forward.3} parent=0 // loop_exit
    _

// kernel: basic_conv_forward.2
$region0: #{basic_conv_forward.2}
  #allocation0 [shape = 'u32[]', space=smem, size = 0x4, offset = 0x4, fixed_abs, tag = 'smem constant byte address 0x4 - core index']
  #allocation1 [shape = 'u32[144,128]{1,0:T(1,128)}', space=vmem, size = 0x12000, scoped, tag = 'internal scratch']
  %s0 = inlined_call_operand.vmem [shape: bf16[2,18,18,4], index: 0, kind: input, shape index: {}]
  %s1 = inlined_call_operand.vmem [shape: bf16[36,128], index: 1, kind: input, shape index: {}]
  %s2 = inlined_call_operand.vmem [shape: bf16[2,8,256], index: 2, kind: output, shape index: {0}]
  %s3 = inlined_call_operand.vmem [shape: f32[2,2,128], index: 3, kind: output, shape index: {1}]
  %4 = xla_tuple %s2, %s3
  %s5 = sld [smem:[#allocation0]]
  $region49: #{basic_conv_forward.2} parent=0
    _
  %s7 = ssub.s32 1, %s5
  %s8 = scalar_select 0, %s7, %s5
  loop: start=0, step=1, limit=4
  $region2: #{basic_conv_forward.2} parent=0 // loop_pre_header
    _
  $region3: #{basic_conv_forward.2} parent=0 // loop_header
    %s10 = sphi 0, %s14
    %p11 = scmp.ge.s32.totalorder %s10, 4
    %s20 = sphi 0, %s22
    %s23 = sphi 0, %s20
    %s24 = sphi 0, %s23
    %s40 = sphi 0, %s24
    %s44 = sphi 0, %s44
    %s46 = sphi 0, %s44
    %s47 = sphi 0, %s46
    %s61 = sphi 0, %s47
    %s67 = sphi 0, %s69
    %s70 = sphi 0, %s67
    %s71 = sphi 0, %s70
    %s87 = sphi 0, %s71
    %s93 = sphi 0, %s95
    %s96 = sphi 0, %s93
    %s97 = sphi 0, %s96
    %s113 = sphi 0, %s97
  $region4: #{basic_conv_forward.2} parent=0 // loop_header_branch
    %13 = sbr.rel (%p11) target = $region8
  $region5: #{basic_conv_forward.2} parent=0 // loop_body
    %s15 = ssub.s32 %s10, 1
    %s16 = ssub.s32 %s10, 2
    %s17 = sadd.s32 %s10, 1
    %s18 = ssub.s32 %s10, %s17
    %p19 = scmp.eq.s32.totalorder %s18, 0
    %s21 = sadd.s32 %s20, 1
    %s22 = scalar_select %p19, %s20, %s21
    %p25 = pneg %p19
    %p26 = scmp.eq.s32.totalorder %s10, 1
    %p27 = por %p25, %p26
    %p28 = scmp.ne.s32.totalorder %s20, %s23
    %p29 = scmp.eq.s32.totalorder %s10, 0
    %p30 = por %p28, %p29
    %p31 = scmp.ne.s32.totalorder %s20, %s23
    %p32 = scmp.eq.s32.totalorder %s15, 1
    %p33 = por %p31, %p32
    %p34 = scmp.ne.s32.totalorder %s23, %s24
    %p35 = scmp.eq.s32.totalorder %s15, 0
    %p36 = por %p34, %p35
    %p37 = scmp.ne.s32.totalorder %s23, %s24
    %p38 = scmp.eq.s32.totalorder %s16, 1
    %p39 = por %p37, %p38
    %p41 = scmp.ne.s32.totalorder %s24, %s40
    %p42 = scmp.eq.s32.totalorder %s16, 0
    %p43 = por %p41, %p42
    %s45 = sadd.s32 %s44, 1
    %p48 = scmp.eq.s32.totalorder %s10, 1
    %p49 = scmp.ne.s32.totalorder %s44, %s46
    %p50 = scmp.eq.s32.totalorder %s10, 0
    %p51 = por %p49, %p50
    %p52 = scmp.ne.s32.totalorder %s44, %s46
    %p53 = scmp.eq.s32.totalorder %s15, 1
    %p54 = por %p52, %p53
    %p55 = scmp.ne.s32.totalorder %s46, %s47
    %p56 = scmp.eq.s32.totalorder %s15, 0
    %p57 = por %p55, %p56
    %p58 = scmp.ne.s32.totalorder %s46, %s47
    %p59 = scmp.eq.s32.totalorder %s16, 1
    %p60 = por %p58, %p59
    %p62 = scmp.ne.s32.totalorder %s47, %s61
    %p63 = scmp.eq.s32.totalorder %s16, 0
    %p64 = por %p62, %p63
    %s65 = ssub.s32 %s10, %s17
    %p66 = scmp.eq.s32.totalorder %s65, 0
    %s68 = sadd.s32 %s67, 1
    %s69 = scalar_select %p66, %s67, %s68
    %p72 = pneg %p66
    %p73 = scmp.eq.s32.totalorder %s10, 1
    %p74 = por %p72, %p73
    %p75 = scmp.ne.s32.totalorder %s67, %s70
    %p76 = scmp.eq.s32.totalorder %s10, 0
    %p77 = por %p75, %p76
    %p78 = scmp.ne.s32.totalorder %s67, %s70
    %p79 = scmp.eq.s32.totalorder %s15, 1
    %p80 = por %p78, %p79
    %p81 = scmp.ne.s32.totalorder %s70, %s71
    %p82 = scmp.eq.s32.totalorder %s15, 0
    %p83 = por %p81, %p82
    %p84 = scmp.ne.s32.totalorder %s70, %s71
    %p85 = scmp.eq.s32.totalorder %s16, 1
    %p86 = por %p84, %p85
    %p88 = scmp.ne.s32.totalorder %s71, %s87
    %p89 = scmp.eq.s32.totalorder %s16, 0
    %p90 = por %p88, %p89
    %s91 = ssub.s32 %s10, %s17
    %p92 = scmp.eq.s32.totalorder %s91, 0
    %s94 = sadd.s32 %s93, 1
    %s95 = scalar_select %p92, %s93, %s94
    %p98 = pneg %p92
    %p99 = scmp.eq.s32.totalorder %s10, 1
    %p100 = por %p98, %p99
    %p101 = scmp.ne.s32.totalorder %s93, %s96
    %p102 = scmp.eq.s32.totalorder %s10, 0
    %p103 = por %p101, %p102
    %p104 = scmp.ne.s32.totalorder %s93, %s96
    %p105 = scmp.eq.s32.totalorder %s15, 1
    %p106 = por %p104, %p105
    %p107 = scmp.ne.s32.totalorder %s96, %s97
    %p108 = scmp.eq.s32.totalorder %s15, 0
    %p109 = por %p107, %p108
    %p110 = scmp.ne.s32.totalorder %s96, %s97
    %p111 = scmp.eq.s32.totalorder %s16, 1
    %p112 = por %p110, %p111
    %p114 = scmp.ne.s32.totalorder %s97, %s113
    %p115 = scmp.eq.s32.totalorder %s16, 0
    %p116 = por %p114, %p115
    %p117 = scmp.le.s32.totalorder 1, %s10
    %p118 = scmp.lt.s32.totalorder %s10, 3
    %p119 = pnand %p117, %p118
    %p120 = pneg %p119
    // Predicated region
    $region9: #{basic_conv_forward.2} parent=5 // pred_check
      _
    $region10: #{basic_conv_forward.2} parent=5 // pred_check_branch
      %122 = sbr.rel (%p119) target = $region12
    $region11: #{basic_conv_forward.2} parent=5 // pred_region
      %s123 = ssub.s32 %s10, 1
      // Predicated region
      $region13: #{basic_conv_forward.2} parent=11 // pred_check
        %p124 = pneg %p57
      $region14: #{basic_conv_forward.2} parent=11 // pred_check_branch
        %126 = sbr.rel (%p124) target = $region16
      $region15: #{basic_conv_forward.2} parent=11 // pred_region
        _
      $region16: #{basic_conv_forward.2} parent=11 // pred_fallthru
        _
    $region12: #{basic_conv_forward.2} parent=5 // pred_fallthru
      _
    %p127 = scmp.lt.s32.totalorder %s10, 2
    // Predicated region
    $region17: #{basic_conv_forward.2} parent=5 // pred_check
      %p128 = pneg %p127
    $region18: #{basic_conv_forward.2} parent=5 // pred_check_branch
      %130 = sbr.rel (%p128) target = $region20
    $region19: #{basic_conv_forward.2} parent=5 // pred_region
      // Predicated region
      $region21: #{basic_conv_forward.2} parent=19 // pred_check
        %p131 = pneg %p30
      $region22: #{basic_conv_forward.2} parent=19 // pred_check_branch
        %133 = sbr.rel (%p131) target = $region24
      $region23: #{basic_conv_forward.2} parent=19 // pred_region
        %p134 = scmp.lt.s32.totalorder %s10, 1
        %s135 = scalar_select %p134, %s10, 1
        %s136 = smul.addr %s135, 54
        %s137 = smul.addr %s136, 4
        %s138 = scalar_lea.vmem %s0, %s137
      $region24: #{basic_conv_forward.2} parent=19 // pred_fallthru
        _
    $region20: #{basic_conv_forward.2} parent=5 // pred_fallthru
      _
    %p139 = scmp.le.s32.totalorder 1, %s10
    %p140 = scmp.lt.s32.totalorder %s10, 3
    %p141 = pnand %p139, %p140
    %p142 = pneg %p141
    // Predicated region
    $region25: #{basic_conv_forward.2} parent=5 // pred_check
      _
    $region26: #{basic_conv_forward.2} parent=5 // pred_check_branch
      %144 = sbr.rel (%p141) target = $region28
    $region27: #{basic_conv_forward.2} parent=5 // pred_region
      %s145 = ssub.s32 %s10, 1
      %p146 = scmp.lt.s32.totalorder %s15, 1
      %s147 = scalar_select %p146, %s15, 1
      %s148 = smul.addr %s147, 54
      %s149 = smul.addr %s148, 4
      %s150 = scalar_lea.vmem %s0, %s149
      %p151 = pneg %p36
      %p152 = pneg %p33
      %p153 = pneg %p57
      %p154 = pneg %p54
      %p155 = pneg %p83
      %p156 = pneg %p80
      %p157 = scmp.lt.s32.totalorder %s15, 1
      %s158 = scalar_select %p157, %s15, 1
      %s159 = smul.addr %s158, 2
      %s160 = smul.addr %s159, 4
      %s161 = scalar_lea.vmem %s2, %s160
      %p162 = pneg %p109
      %p163 = pneg %p106
      %p164 = scmp.lt.s32.totalorder %s15, 1
      %s165 = scalar_select %p164, %s15, 1
      %s166 = smul.addr %s165, 2
      %s167 = scalar_lea.vmem %s3, %s166
      %p168 = scmp.lt.s32.totalorder %s15, 1
      %s169 = scalar_select %p168, %s15, 1
      %s170 = smul.addr %s169, 54
      %s171 = smul.addr %s170, 4
      %s172 = scalar_lea.vmem %s0, %s171
      %p173 = scmp.lt.s32.totalorder %s15, 1
      %s174 = scalar_select %p173, %s15, 1
      %s175 = smul.addr %s174, 2
      %s176 = smul.addr %s175, 4
      %s177 = scalar_lea.vmem %s2, %s176
      %p178 = scmp.lt.s32.totalorder %s15, 1
      %s179 = scalar_select %p178, %s15, 1
      %s180 = smul.addr %s179, 2
      %s181 = scalar_lea.vmem %s3, %s180
      %v183 = vld [vmem:[%s172] sm:$0xf]
      %v184 = vld [vmem:[%s172 + $0x4] sm:$0xf]
      %v185 = vld [vmem:[%s172 + $0xc] sm:$0xf]
      %v186 = vld [vmem:[%s172 + $0x10] sm:$0xf]
      %v187 = vld [vmem:[%s172 + $0x18] sm:$0xf]
      %v188 = vld [vmem:[%s172 + $0x1c] sm:$0xf]
      %v189 = vld [vmem:[%s172 + $0x24] sm:$0xf]
      %v190 = vld [vmem:[%s172 + $0x28] sm:$0xf]
      %v191 = vld [vmem:[%s172 + $0x30] sm:$0xf]
      %v192 = vld [vmem:[%s172 + $0x34] sm:$0xf]
      %v193 = vld [vmem:[%s172 + $0x3c] sm:$0xf]
      %v194 = vld [vmem:[%s172 + $0x40] sm:$0xf]
      %v195 = vld [vmem:[%s172 + $0x48] sm:$0xf]
      %v196 = vld [vmem:[%s172 + $0x4c] sm:$0xf]
      %v197 = vld [vmem:[%s172 + $0x54] sm:$0xf]
      %v198 = vld [vmem:[%s172 + $0x58] sm:$0xf]
      %v199 = vld [vmem:[%s172 + $0x60] sm:$0xf]
      %v200 = vld [vmem:[%s172 + $0x64] sm:$0xf]
      %v201 = vld [vmem:[%s172 + $0x6c] sm:$0xf]
      %v202 = vld [vmem:[%s172 + $0x70] sm:$0xf]
      %v203 = vld [vmem:[%s172 + $0x78] sm:$0xf]
      %v204 = vld [vmem:[%s172 + $0x7c] sm:$0xf]
      %v205 = vld [vmem:[%s172 + $0x84] sm:$0xf]
      %v206 = vld [vmem:[%s172 + $0x88] sm:$0xf]
      %v207 = vld [vmem:[%s172 + $0x90] sm:$0xf]
      %v208 = vld [vmem:[%s172 + $0x94] sm:$0xf]
      %v209 = vld [vmem:[%s172 + $0x9c] sm:$0xf]
      %v210 = vld [vmem:[%s172 + $0xa0] sm:$0xf]
      %v211 = vld [vmem:[%s172 + $0xa8] sm:$0xf]
      %v212 = vld [vmem:[%s172 + $0xac] sm:$0xf]
      %v213 = vld [vmem:[%s172 + $0xb4] sm:$0xf]
      %v214 = vld [vmem:[%s172 + $0xb8] sm:$0xf]
      %v215 = vld [vmem:[%s172 + $0x8] sm:$0x1]
      %v216 = vld [vmem:[%s172 + $0x14] sm:$0x1]
      %v217 = vld [vmem:[%s172 + $0x20] sm:$0x1]
      %v218 = vld [vmem:[%s172 + $0x2c] sm:$0x1]
      %v219 = vld [vmem:[%s172 + $0x38] sm:$0x1]
      %v220 = vld [vmem:[%s172 + $0x44] sm:$0x1]
      %v221 = vld [vmem:[%s172 + $0x50] sm:$0x1]
      %v222 = vld [vmem:[%s172 + $0x5c] sm:$0x1]
      %v223 = vld [vmem:[%s172 + $0x68] sm:$0x1]
      %v224 = vld [vmem:[%s172 + $0x74] sm:$0x1]
      %v225 = vld [vmem:[%s172 + $0x80] sm:$0x1]
      %v226 = vld [vmem:[%s172 + $0x8c] sm:$0x1]
      %v227 = vld [vmem:[%s172 + $0x98] sm:$0x1]
      %v228 = vld [vmem:[%s172 + $0xa4] sm:$0x1]
      %v229 = vld [vmem:[%s172 + $0xb0] sm:$0x1]
      %v230 = vld [vmem:[%s172 + $0xbc] sm:$0x1]
      %vm231 = vsmask.f32 3328
      %vm232 = vsmask.f32 7440
      %vm233 = vmor %vm231, %vm232
      %v235 = vshrl.u32 %v183, 16
      %v237 = vrot.slane %v235, 4
      %v238 = vshll.u32 %v183, 16
      %v240 = vrot.slane %v238, 5
      %v241 = vor.u32 %v237, %v240
      %v242 = vrot.slane %v241, 4
      %v244 = vshll.u32 %v184, 16
      %v246 = vrot.slane %v244, 5
      %v247 = vsel %vm233, %v242, %v246
      %v248 = vshrl.u32 %v184, 16
      %v250 = vrot.slane %v248, 4
      %v251 = vor.u32 %v250, %v246
      %v252 = vrot.slane %v251, 4
      %v254 = vshll.u32 %v215, 16
      %v256 = vrot.slane %v254, 5
      %v257 = vsel %vm233, %v252, %v256
      %v259 = vshrl.u32 %v185, 16
      %v261 = vrot.slane %v259, 4
      %v262 = vshll.u32 %v185, 16
      %v264 = vrot.slane %v262, 5
      %v265 = vor.u32 %v261, %v264
      %v266 = vrot.slane %v265, 4
      %v268 = vshll.u32 %v186, 16
      %v270 = vrot.slane %v268, 5
      %v271 = vsel %vm233, %v266, %v270
      %v272 = vshrl.u32 %v186, 16
      %v274 = vrot.slane %v272, 4
      %v275 = vor.u32 %v274, %v270
      %v276 = vrot.slane %v275, 4
      %v278 = vshll.u32 %v216, 16
      %v280 = vrot.slane %v278, 5
      %v281 = vsel %vm233, %v276, %v280
      %v283 = vshrl.u32 %v187, 16
      %v285 = vrot.slane %v283, 4
      %v286 = vshll.u32 %v187, 16
      %v288 = vrot.slane %v286, 5
      %v289 = vor.u32 %v285, %v288
      %v290 = vrot.slane %v289, 4
      %v292 = vshll.u32 %v188, 16
      %v294 = vrot.slane %v292, 5
      %v295 = vsel %vm233, %v290, %v294
      %v296 = vshrl.u32 %v188, 16
      %v298 = vrot.slane %v296, 4
      %v299 = vor.u32 %v298, %v294
      %v300 = vrot.slane %v299, 4
      %v302 = vshll.u32 %v217, 16
      %v304 = vrot.slane %v302, 5
      %v305 = vsel %vm233, %v300, %v304
      %v307 = vshrl.u32 %v189, 16
      %v309 = vrot.slane %v307, 4
      %v310 = vshll.u32 %v189, 16
      %v312 = vrot.slane %v310, 5
      %v313 = vor.u32 %v309, %v312
      %v314 = vrot.slane %v313, 4
      %v316 = vshll.u32 %v190, 16
      %v318 = vrot.slane %v316, 5
      %v319 = vsel %vm233, %v314, %v318
      %v320 = vshrl.u32 %v190, 16
      %v322 = vrot.slane %v320, 4
      %v323 = vor.u32 %v322, %v318
      %v324 = vrot.slane %v323, 4
      %v326 = vshll.u32 %v218, 16
      %v328 = vrot.slane %v326, 5
      %v329 = vsel %vm233, %v324, %v328
      %v331 = vshrl.u32 %v191, 16
      %v333 = vrot.slane %v331, 4
      %v334 = vshll.u32 %v191, 16
      %v336 = vrot.slane %v334, 5
      %v337 = vor.u32 %v333, %v336
      %v338 = vrot.slane %v337, 4
      %v340 = vshll.u32 %v192, 16
      %v342 = vrot.slane %v340, 5
      %v343 = vsel %vm233, %v338, %v342
      %v344 = vshrl.u32 %v192, 16
      %v346 = vrot.slane %v344, 4
      %v347 = vor.u32 %v346, %v342
      %v348 = vrot.slane %v347, 4
      %v350 = vshll.u32 %v219, 16
      %v352 = vrot.slane %v350, 5
      %v353 = vsel %vm233, %v348, %v352
      %v355 = vshrl.u32 %v193, 16
      %v357 = vrot.slane %v355, 4
      %v358 = vshll.u32 %v193, 16
      %v360 = vrot.slane %v358, 5
      %v361 = vor.u32 %v357, %v360
      %v362 = vrot.slane %v361, 4
      %v364 = vshll.u32 %v194, 16
      %v366 = vrot.slane %v364, 5
      %v367 = vsel %vm233, %v362, %v366
      %v368 = vshrl.u32 %v194, 16
      %v370 = vrot.slane %v368, 4
      %v371 = vor.u32 %v370, %v366
      %v372 = vrot.slane %v371, 4
      %v374 = vshll.u32 %v220, 16
      %v376 = vrot.slane %v374, 5
      %v377 = vsel %vm233, %v372, %v376
      %v379 = vshrl.u32 %v195, 16
      %v381 = vrot.slane %v379, 4
      %v382 = vshll.u32 %v195, 16
      %v384 = vrot.slane %v382, 5
      %v385 = vor.u32 %v381, %v384
      %v386 = vrot.slane %v385, 4
      %v388 = vshll.u32 %v196, 16
      %v390 = vrot.slane %v388, 5
      %v391 = vsel %vm233, %v386, %v390
      %v392 = vshrl.u32 %v196, 16
      %v394 = vrot.slane %v392, 4
      %v395 = vor.u32 %v394, %v390
      %v396 = vrot.slane %v395, 4
      %v398 = vshll.u32 %v221, 16
      %v400 = vrot.slane %v398, 5
      %v401 = vsel %vm233, %v396, %v400
      %v403 = vshrl.u32 %v197, 16
      %v405 = vrot.slane %v403, 4
      %v406 = vshll.u32 %v197, 16
      %v408 = vrot.slane %v406, 5
      %v409 = vor.u32 %v405, %v408
      %v410 = vrot.slane %v409, 4
      %v412 = vshll.u32 %v198, 16
      %v414 = vrot.slane %v412, 5
      %v415 = vsel %vm233, %v410, %v414
      %v416 = vshrl.u32 %v198, 16
      %v418 = vrot.slane %v416, 4
      %v419 = vor.u32 %v418, %v414
      %v420 = vrot.slane %v419, 4
      %v422 = vshll.u32 %v222, 16
      %v424 = vrot.slane %v422, 5
      %v425 = vsel %vm233, %v420, %v424
      %v427 = vshrl.u32 %v199, 16
      %v429 = vrot.slane %v427, 4
      %v430 = vshll.u32 %v199, 16
      %v432 = vrot.slane %v430, 5
      %v433 = vor.u32 %v429, %v432
      %v434 = vrot.slane %v433, 4
      %v436 = vshll.u32 %v200, 16
      %v438 = vrot.slane %v436, 5
      %v439 = vsel %vm233, %v434, %v438
      %v440 = vshrl.u32 %v200, 16
      %v442 = vrot.slane %v440, 4
      %v443 = vor.u32 %v442, %v438
      %v444 = vrot.slane %v443, 4
      %v446 = vshll.u32 %v223, 16
      %v448 = vrot.slane %v446, 5
      %v449 = vsel %vm233, %v444, %v448
      %v451 = vshrl.u32 %v201, 16
      %v453 = vrot.slane %v451, 4
      %v454 = vshll.u32 %v201, 16
      %v456 = vrot.slane %v454, 5
      %v457 = vor.u32 %v453, %v456
      %v458 = vrot.slane %v457, 4
      %v460 = vshll.u32 %v202, 16
      %v462 = vrot.slane %v460, 5
      %v463 = vsel %vm233, %v458, %v462
      %v464 = vshrl.u32 %v202, 16
      %v466 = vrot.slane %v464, 4
      %v467 = vor.u32 %v466, %v462
      %v468 = vrot.slane %v467, 4
      %v470 = vshll.u32 %v224, 16
      %v472 = vrot.slane %v470, 5
      %v473 = vsel %vm233, %v468, %v472
      %v475 = vshrl.u32 %v203, 16
      %v477 = vrot.slane %v475, 4
      %v478 = vshll.u32 %v203, 16
      %v480 = vrot.slane %v478, 5
      %v481 = vor.u32 %v477, %v480
      %v482 = vrot.slane %v481, 4
      %v484 = vshll.u32 %v204, 16
      %v486 = vrot.slane %v484, 5
      %v487 = vsel %vm233, %v482, %v486
      %v488 = vshrl.u32 %v204, 16
      %v490 = vrot.slane %v488, 4
      %v491 = vor.u32 %v490, %v486
      %v492 = vrot.slane %v491, 4
      %v494 = vshll.u32 %v225, 16
      %v496 = vrot.slane %v494, 5
      %v497 = vsel %vm233, %v492, %v496
      %v499 = vshrl.u32 %v205, 16
      %v501 = vrot.slane %v499, 4
      %v502 = vshll.u32 %v205, 16
      %v504 = vrot.slane %v502, 5
      %v505 = vor.u32 %v501, %v504
      %v506 = vrot.slane %v505, 4
      %v508 = vshll.u32 %v206, 16
      %v510 = vrot.slane %v508, 5
      %v511 = vsel %vm233, %v506, %v510
      %v512 = vshrl.u32 %v206, 16
      %v514 = vrot.slane %v512, 4
      %v515 = vor.u32 %v514, %v510
      %v516 = vrot.slane %v515, 4
      %v518 = vshll.u32 %v226, 16
      %v520 = vrot.slane %v518, 5
      %v521 = vsel %vm233, %v516, %v520
      %v523 = vshrl.u32 %v207, 16
      %v525 = vrot.slane %v523, 4
      %v526 = vshll.u32 %v207, 16
      %v528 = vrot.slane %v526, 5
      %v529 = vor.u32 %v525, %v528
      %v530 = vrot.slane %v529, 4
      %v532 = vshll.u32 %v208, 16
      %v534 = vrot.slane %v532, 5
      %v535 = vsel %vm233, %v530, %v534
      %v536 = vshrl.u32 %v208, 16
      %v538 = vrot.slane %v536, 4
      %v539 = vor.u32 %v538, %v534
      %v540 = vrot.slane %v539, 4
      %v542 = vshll.u32 %v227, 16
      %v544 = vrot.slane %v542, 5
      %v545 = vsel %vm233, %v540, %v544
      %v547 = vshrl.u32 %v209, 16
      %v549 = vrot.slane %v547, 4
      %v550 = vshll.u32 %v209, 16
      %v552 = vrot.slane %v550, 5
      %v553 = vor.u32 %v549, %v552
      %v554 = vrot.slane %v553, 4
      %v556 = vshll.u32 %v210, 16
      %v558 = vrot.slane %v556, 5
      %v559 = vsel %vm233, %v554, %v558
      %v560 = vshrl.u32 %v210, 16
      %v562 = vrot.slane %v560, 4
      %v563 = vor.u32 %v562, %v558
      %v564 = vrot.slane %v563, 4
      %v566 = vshll.u32 %v228, 16
      %v568 = vrot.slane %v566, 5
      %v569 = vsel %vm233, %v564, %v568
      %v571 = vshrl.u32 %v211, 16
      %v573 = vrot.slane %v571, 4
      %v574 = vshll.u32 %v211, 16
      %v576 = vrot.slane %v574, 5
      %v577 = vor.u32 %v573, %v576
      %v578 = vrot.slane %v577, 4
      %v580 = vshll.u32 %v212, 16
      %v582 = vrot.slane %v580, 5
      %v583 = vsel %vm233, %v578, %v582
      %v584 = vshrl.u32 %v212, 16
      %v586 = vrot.slane %v584, 4
      %v587 = vor.u32 %v586, %v582
      %v588 = vrot.slane %v587, 4
      %v590 = vshll.u32 %v229, 16
      %v592 = vrot.slane %v590, 5
      %v593 = vsel %vm233, %v588, %v592
      %v595 = vshrl.u32 %v213, 16
      %v597 = vrot.slane %v595, 4
      %v598 = vshll.u32 %v213, 16
      %v600 = vrot.slane %v598, 5
      %v601 = vor.u32 %v597, %v600
      %v602 = vrot.slane %v601, 4
      %v604 = vshll.u32 %v214, 16
      %v606 = vrot.slane %v604, 5
      %v607 = vsel %vm233, %v602, %v606
      %v608 = vshrl.u32 %v214, 16
      %v610 = vrot.slane %v608, 4
      %v611 = vor.u32 %v610, %v606
      %v612 = vrot.slane %v611, 4
      %v614 = vshll.u32 %v230, 16
      %v616 = vrot.slane %v614, 5
      %v617 = vsel %vm233, %v612, %v616
      %v618 = vld [vmem:[%s172] sm:$0xe]
      %v619 = vld [vmem:[%s172 + $0xc] sm:$0xe]
      %v620 = vld [vmem:[%s172 + $0x18] sm:$0xe]
      %v621 = vld [vmem:[%s172 + $0x24] sm:$0xe]
      %v622 = vld [vmem:[%s172 + $0x30] sm:$0xe]
      %v623 = vld [vmem:[%s172 + $0x3c] sm:$0xe]
      %v624 = vld [vmem:[%s172 + $0x48] sm:$0xe]
      %v625 = vld [vmem:[%s172 + $0x54] sm:$0xe]
      %v626 = vld [vmem:[%s172 + $0x60] sm:$0xe]
      %v627 = vld [vmem:[%s172 + $0x6c] sm:$0xe]
      %v628 = vld [vmem:[%s172 + $0x78] sm:$0xe]
      %v629 = vld [vmem:[%s172 + $0x84] sm:$0xe]
      %v630 = vld [vmem:[%s172 + $0x90] sm:$0xe]
      %v631 = vld [vmem:[%s172 + $0x9c] sm:$0xe]
      %v632 = vld [vmem:[%s172 + $0xa8] sm:$0xe]
      %v633 = vld [vmem:[%s172 + $0xb4] sm:$0xe]
      %vm682 = vcmask 1042432
      %vm683 = vcmask 1046532
      %vm684 = vmor %vm682, %vm683
      %v685 = vrot.slane %v618, 5
      %v686 = vrot.slane %v685, 4
      %v687 = vrot.slane %v184, 5
      %v688 = vsel %vm684, %v686, %v687
      %v689 = vrot.slane %v687, 4
      %v690 = vrot.slane %v215, 5
      %v691 = vsel %vm684, %v689, %v690
      %v692 = vrot.slane %v619, 5
      %v693 = vrot.slane %v692, 4
      %v694 = vrot.slane %v186, 5
      %v695 = vsel %vm684, %v693, %v694
      %v696 = vrot.slane %v694, 4
      %v697 = vrot.slane %v216, 5
      %v698 = vsel %vm684, %v696, %v697
      %v699 = vrot.slane %v620, 5
      %v700 = vrot.slane %v699, 4
      %v701 = vrot.slane %v188, 5
      %v702 = vsel %vm684, %v700, %v701
      %v703 = vrot.slane %v701, 4
      %v704 = vrot.slane %v217, 5
      %v705 = vsel %vm684, %v703, %v704
      %v706 = vrot.slane %v621, 5
      %v707 = vrot.slane %v706, 4
      %v708 = vrot.slane %v190, 5
      %v709 = vsel %vm684, %v707, %v708
      %v710 = vrot.slane %v708, 4
      %v711 = vrot.slane %v218, 5
      %v712 = vsel %vm684, %v710, %v711
      %v713 = vrot.slane %v622, 5
      %v714 = vrot.slane %v713, 4
      %v715 = vrot.slane %v192, 5
      %v716 = vsel %vm684, %v714, %v715
      %v717 = vrot.slane %v715, 4
      %v718 = vrot.slane %v219, 5
      %v719 = vsel %vm684, %v717, %v718
      %v720 = vrot.slane %v623, 5
      %v721 = vrot.slane %v720, 4
      %v722 = vrot.slane %v194, 5
      %v723 = vsel %vm684, %v721, %v722
      %v724 = vrot.slane %v722, 4
      %v725 = vrot.slane %v220, 5
      %v726 = vsel %vm684, %v724, %v725
      %v727 = vrot.slane %v624, 5
      %v728 = vrot.slane %v727, 4
      %v729 = vrot.slane %v196, 5
      %v730 = vsel %vm684, %v728, %v729
      %v731 = vrot.slane %v729, 4
      %v732 = vrot.slane %v221, 5
      %v733 = vsel %vm684, %v731, %v732
      %v734 = vrot.slane %v625, 5
      %v735 = vrot.slane %v734, 4
      %v736 = vrot.slane %v198, 5
      %v737 = vsel %vm684, %v735, %v736
      %v738 = vrot.slane %v736, 4
      %v739 = vrot.slane %v222, 5
      %v740 = vsel %vm684, %v738, %v739
      %v741 = vrot.slane %v626, 5
      %v742 = vrot.slane %v741, 4
      %v743 = vrot.slane %v200, 5
      %v744 = vsel %vm684, %v742, %v743
      %v745 = vrot.slane %v743, 4
      %v746 = vrot.slane %v223, 5
      %v747 = vsel %vm684, %v745, %v746
      %v748 = vrot.slane %v627, 5
      %v749 = vrot.slane %v748, 4
      %v750 = vrot.slane %v202, 5
      %v751 = vsel %vm684, %v749, %v750
      %v752 = vrot.slane %v750, 4
      %v753 = vrot.slane %v224, 5
      %v754 = vsel %vm684, %v752, %v753
      %v755 = vrot.slane %v628, 5
      %v756 = vrot.slane %v755, 4
      %v757 = vrot.slane %v204, 5
      %v758 = vsel %vm684, %v756, %v757
      %v759 = vrot.slane %v757, 4
      %v760 = vrot.slane %v225, 5
      %v761 = vsel %vm684, %v759, %v760
      %v762 = vrot.slane %v629, 5
      %v763 = vrot.slane %v762, 4
      %v764 = vrot.slane %v206, 5
      %v765 = vsel %vm684, %v763, %v764
      %v766 = vrot.slane %v764, 4
      %v767 = vrot.slane %v226, 5
      %v768 = vsel %vm684, %v766, %v767
      %v769 = vrot.slane %v630, 5
      %v770 = vrot.slane %v769, 4
      %v771 = vrot.slane %v208, 5
      %v772 = vsel %vm684, %v770, %v771
      %v773 = vrot.slane %v771, 4
      %v774 = vrot.slane %v227, 5
      %v775 = vsel %vm684, %v773, %v774
      %v776 = vrot.slane %v631, 5
      %v777 = vrot.slane %v776, 4
      %v778 = vrot.slane %v210, 5
      %v779 = vsel %vm684, %v777, %v778
      %v780 = vrot.slane %v778, 4
      %v781 = vrot.slane %v228, 5
      %v782 = vsel %vm684, %v780, %v781
      %v783 = vrot.slane %v632, 5
      %v784 = vrot.slane %v783, 4
      %v785 = vrot.slane %v212, 5
      %v786 = vsel %vm684, %v784, %v785
      %v787 = vrot.slane %v785, 4
      %v788 = vrot.slane %v229, 5
      %v789 = vsel %vm684, %v787, %v788
      %v790 = vrot.slane %v633, 5
      %v791 = vrot.slane %v790, 4
      %v792 = vrot.slane %v214, 5
      %v793 = vsel %vm684, %v791, %v792
      %v794 = vrot.slane %v792, 4
      %v795 = vrot.slane %v230, 5
      %v796 = vsel %vm684, %v794, %v795
      %s797 = scalar_lea.vmem %s172, 12
      %v798 = vld [vmem:[%s797] sm:$0xf]
      %v799 = vld [vmem:[%s797 + $0x4] sm:$0xf]
      %v800 = vld [vmem:[%s797 + $0xc] sm:$0xf]
      %v801 = vld [vmem:[%s797 + $0x10] sm:$0xf]
      %v802 = vld [vmem:[%s797 + $0x18] sm:$0xf]
      %v803 = vld [vmem:[%s797 + $0x1c] sm:$0xf]
      %v804 = vld [vmem:[%s797 + $0x24] sm:$0xf]
      %v805 = vld [vmem:[%s797 + $0x28] sm:$0xf]
      %v806 = vld [vmem:[%s797 + $0x30] sm:$0xf]
      %v807 = vld [vmem:[%s797 + $0x34] sm:$0xf]
      %v808 = vld [vmem:[%s797 + $0x3c] sm:$0xf]
      %v809 = vld [vmem:[%s797 + $0x40] sm:$0xf]
      %v810 = vld [vmem:[%s797 + $0x48] sm:$0xf]
      %v811 = vld [vmem:[%s797 + $0x4c] sm:$0xf]
      %v812 = vld [vmem:[%s797 + $0x54] sm:$0xf]
      %v813 = vld [vmem:[%s797 + $0x58] sm:$0xf]
      %v814 = vld [vmem:[%s797 + $0x60] sm:$0xf]
      %v815 = vld [vmem:[%s797 + $0x64] sm:$0xf]
      %v816 = vld [vmem:[%s797 + $0x6c] sm:$0xf]
      %v817 = vld [vmem:[%s797 + $0x70] sm:$0xf]
      %v818 = vld [vmem:[%s797 + $0x78] sm:$0xf]
      %v819 = vld [vmem:[%s797 + $0x7c] sm:$0xf]
      %v820 = vld [vmem:[%s797 + $0x84] sm:$0xf]
      %v821 = vld [vmem:[%s797 + $0x88] sm:$0xf]
      %v822 = vld [vmem:[%s797 + $0x90] sm:$0xf]
      %v823 = vld [vmem:[%s797 + $0x94] sm:$0xf]
      %v824 = vld [vmem:[%s797 + $0x9c] sm:$0xf]
      %v825 = vld [vmem:[%s797 + $0xa0] sm:$0xf]
      %v826 = vld [vmem:[%s797 + $0xa8] sm:$0xf]
      %v827 = vld [vmem:[%s797 + $0xac] sm:$0xf]
      %v828 = vld [vmem:[%s797 + $0xb4] sm:$0xf]
      %v829 = vld [vmem:[%s797 + $0xb8] sm:$0xf]
      %v830 = vld [vmem:[%s797 + $0x8] sm:$0x1]
      %v831 = vld [vmem:[%s797 + $0x14] sm:$0x1]
      %v832 = vld [vmem:[%s797 + $0x20] sm:$0x1]
      %v833 = vld [vmem:[%s797 + $0x2c] sm:$0x1]
      %v834 = vld [vmem:[%s797 + $0x38] sm:$0x1]
      %v835 = vld [vmem:[%s797 + $0x44] sm:$0x1]
      %v836 = vld [vmem:[%s797 + $0x50] sm:$0x1]
      %v837 = vld [vmem:[%s797 + $0x5c] sm:$0x1]
      %v838 = vld [vmem:[%s797 + $0x68] sm:$0x1]
      %v839 = vld [vmem:[%s797 + $0x74] sm:$0x1]
      %v840 = vld [vmem:[%s797 + $0x80] sm:$0x1]
      %v841 = vld [vmem:[%s797 + $0x8c] sm:$0x1]
      %v842 = vld [vmem:[%s797 + $0x98] sm:$0x1]
      %v843 = vld [vmem:[%s797 + $0xa4] sm:$0x1]
      %v844 = vld [vmem:[%s797 + $0xb0] sm:$0x1]
      %v845 = vld [vmem:[%s797 + $0xbc] sm:$0x1]
      %v847 = vshrl.u32 %v798, 16
      %v849 = vrot.slane %v847, 4
      %v850 = vshll.u32 %v798, 16
      %v852 = vrot.slane %v850, 5
      %v853 = vor.u32 %v849, %v852
      %v854 = vrot.slane %v853, 4
      %v856 = vshll.u32 %v799, 16
      %v858 = vrot.slane %v856, 5
      %v859 = vsel %vm233, %v854, %v858
      %v860 = vshrl.u32 %v799, 16
      %v862 = vrot.slane %v860, 4
      %v863 = vor.u32 %v862, %v858
      %v864 = vrot.slane %v863, 4
      %v866 = vshll.u32 %v830, 16
      %v868 = vrot.slane %v866, 5
      %v869 = vsel %vm233, %v864, %v868
      %v871 = vshrl.u32 %v800, 16
      %v873 = vrot.slane %v871, 4
      %v874 = vshll.u32 %v800, 16
      %v876 = vrot.slane %v874, 5
      %v877 = vor.u32 %v873, %v876
      %v878 = vrot.slane %v877, 4
      %v880 = vshll.u32 %v801, 16
      %v882 = vrot.slane %v880, 5
      %v883 = vsel %vm233, %v878, %v882
      %v884 = vshrl.u32 %v801, 16
      %v886 = vrot.slane %v884, 4
      %v887 = vor.u32 %v886, %v882
      %v888 = vrot.slane %v887, 4
      %v890 = vshll.u32 %v831, 16
      %v892 = vrot.slane %v890, 5
      %v893 = vsel %vm233, %v888, %v892
      %v895 = vshrl.u32 %v802, 16
      %v897 = vrot.slane %v895, 4
      %v898 = vshll.u32 %v802, 16
      %v900 = vrot.slane %v898, 5
      %v901 = vor.u32 %v897, %v900
      %v902 = vrot.slane %v901, 4
      %v904 = vshll.u32 %v803, 16
      %v906 = vrot.slane %v904, 5
      %v907 = vsel %vm233, %v902, %v906
      %v908 = vshrl.u32 %v803, 16
      %v910 = vrot.slane %v908, 4
      %v911 = vor.u32 %v910, %v906
      %v912 = vrot.slane %v911, 4
      %v914 = vshll.u32 %v832, 16
      %v916 = vrot.slane %v914, 5
      %v917 = vsel %vm233, %v912, %v916
      %v919 = vshrl.u32 %v804, 16
      %v921 = vrot.slane %v919, 4
      %v922 = vshll.u32 %v804, 16
      %v924 = vrot.slane %v922, 5
      %v925 = vor.u32 %v921, %v924
      %v926 = vrot.slane %v925, 4
      %v928 = vshll.u32 %v805, 16
      %v930 = vrot.slane %v928, 5
      %v931 = vsel %vm233, %v926, %v930
      %v932 = vshrl.u32 %v805, 16
      %v934 = vrot.slane %v932, 4
      %v935 = vor.u32 %v934, %v930
      %v936 = vrot.slane %v935, 4
      %v938 = vshll.u32 %v833, 16
      %v940 = vrot.slane %v938, 5
      %v941 = vsel %vm233, %v936, %v940
      %v943 = vshrl.u32 %v806, 16
      %v945 = vrot.slane %v943, 4
      %v946 = vshll.u32 %v806, 16
      %v948 = vrot.slane %v946, 5
      %v949 = vor.u32 %v945, %v948
      %v950 = vrot.slane %v949, 4
      %v952 = vshll.u32 %v807, 16
      %v954 = vrot.slane %v952, 5
      %v955 = vsel %vm233, %v950, %v954
      %v956 = vshrl.u32 %v807, 16
      %v958 = vrot.slane %v956, 4
      %v959 = vor.u32 %v958, %v954
      %v960 = vrot.slane %v959, 4
      %v962 = vshll.u32 %v834, 16
      %v964 = vrot.slane %v962, 5
      %v965 = vsel %vm233, %v960, %v964
      %v967 = vshrl.u32 %v808, 16
      %v969 = vrot.slane %v967, 4
      %v970 = vshll.u32 %v808, 16
      %v972 = vrot.slane %v970, 5
      %v973 = vor.u32 %v969, %v972
      %v974 = vrot.slane %v973, 4
      %v976 = vshll.u32 %v809, 16
      %v978 = vrot.slane %v976, 5
      %v979 = vsel %vm233, %v974, %v978
      %v980 = vshrl.u32 %v809, 16
      %v982 = vrot.slane %v980, 4
      %v983 = vor.u32 %v982, %v978
      %v984 = vrot.slane %v983, 4
      %v986 = vshll.u32 %v835, 16
      %v988 = vrot.slane %v986, 5
      %v989 = vsel %vm233, %v984, %v988
      %v991 = vshrl.u32 %v810, 16
      %v993 = vrot.slane %v991, 4
      %v994 = vshll.u32 %v810, 16
      %v996 = vrot.slane %v994, 5
      %v997 = vor.u32 %v993, %v996
      %v998 = vrot.slane %v997, 4
      %v1000 = vshll.u32 %v811, 16
      %v1002 = vrot.slane %v1000, 5
      %v1003 = vsel %vm233, %v998, %v1002
      %v1004 = vshrl.u32 %v811, 16
      %v1006 = vrot.slane %v1004, 4
      %v1007 = vor.u32 %v1006, %v1002
      %v1008 = vrot.slane %v1007, 4
      %v1010 = vshll.u32 %v836, 16
      %v1012 = vrot.slane %v1010, 5
      %v1013 = vsel %vm233, %v1008, %v1012
      %v1015 = vshrl.u32 %v812, 16
      %v1017 = vrot.slane %v1015, 4
      %v1018 = vshll.u32 %v812, 16
      %v1020 = vrot.slane %v1018, 5
      %v1021 = vor.u32 %v1017, %v1020
      %v1022 = vrot.slane %v1021, 4
      %v1024 = vshll.u32 %v813, 16
      %v1026 = vrot.slane %v1024, 5
      %v1027 = vsel %vm233, %v1022, %v1026
      %v1028 = vshrl.u32 %v813, 16
      %v1030 = vrot.slane %v1028, 4
      %v1031 = vor.u32 %v1030, %v1026
      %v1032 = vrot.slane %v1031, 4
      %v1034 = vshll.u32 %v837, 16
      %v1036 = vrot.slane %v1034, 5
      %v1037 = vsel %vm233, %v1032, %v1036
      %v1039 = vshrl.u32 %v814, 16
      %v1041 = vrot.slane %v1039, 4
      %v1042 = vshll.u32 %v814, 16
      %v1044 = vrot.slane %v1042, 5
      %v1045 = vor.u32 %v1041, %v1044
      %v1046 = vrot.slane %v1045, 4
      %v1048 = vshll.u32 %v815, 16
      %v1050 = vrot.slane %v1048, 5
      %v1051 = vsel %vm233, %v1046, %v1050
      %v1052 = vshrl.u32 %v815, 16
      %v1054 = vrot.slane %v1052, 4
      %v1055 = vor.u32 %v1054, %v1050
      %v1056 = vrot.slane %v1055, 4
      %v1058 = vshll.u32 %v838, 16
      %v1060 = vrot.slane %v1058, 5
      %v1061 = vsel %vm233, %v1056, %v1060
      %v1063 = vshrl.u32 %v816, 16
      %v1065 = vrot.slane %v1063, 4
      %v1066 = vshll.u32 %v816, 16
      %v1068 = vrot.slane %v1066, 5
      %v1069 = vor.u32 %v1065, %v1068
      %v1070 = vrot.slane %v1069, 4
      %v1072 = vshll.u32 %v817, 16
      %v1074 = vrot.slane %v1072, 5
      %v1075 = vsel %vm233, %v1070, %v1074
      %v1076 = vshrl.u32 %v817, 16
      %v1078 = vrot.slane %v1076, 4
      %v1079 = vor.u32 %v1078, %v1074
      %v1080 = vrot.slane %v1079, 4
      %v1082 = vshll.u32 %v839, 16
      %v1084 = vrot.slane %v1082, 5
      %v1085 = vsel %vm233, %v1080, %v1084
      %v1087 = vshrl.u32 %v818, 16
      %v1089 = vrot.slane %v1087, 4
      %v1090 = vshll.u32 %v818, 16
      %v1092 = vrot.slane %v1090, 5
      %v1093 = vor.u32 %v1089, %v1092
      %v1094 = vrot.slane %v1093, 4
      %v1096 = vshll.u32 %v819, 16
      %v1098 = vrot.slane %v1096, 5
      %v1099 = vsel %vm233, %v1094, %v1098
      %v1100 = vshrl.u32 %v819, 16
      %v1102 = vrot.slane %v1100, 4
      %v1103 = vor.u32 %v1102, %v1098
      %v1104 = vrot.slane %v1103, 4
      %v1106 = vshll.u32 %v840, 16
      %v1108 = vrot.slane %v1106, 5
      %v1109 = vsel %vm233, %v1104, %v1108
      %v1111 = vshrl.u32 %v820, 16
      %v1113 = vrot.slane %v1111, 4
      %v1114 = vshll.u32 %v820, 16
      %v1116 = vrot.slane %v1114, 5
      %v1117 = vor.u32 %v1113, %v1116
      %v1118 = vrot.slane %v1117, 4
      %v1120 = vshll.u32 %v821, 16
      %v1122 = vrot.slane %v1120, 5
      %v1123 = vsel %vm233, %v1118, %v1122
      %v1124 = vshrl.u32 %v821, 16
      %v1126 = vrot.slane %v1124, 4
      %v1127 = vor.u32 %v1126, %v1122
      %v1128 = vrot.slane %v1127, 4
      %v1130 = vshll.u32 %v841, 16
      %v1132 = vrot.slane %v1130, 5
      %v1133 = vsel %vm233, %v1128, %v1132
      %v1135 = vshrl.u32 %v822, 16
      %v1137 = vrot.slane %v1135, 4
      %v1138 = vshll.u32 %v822, 16
      %v1140 = vrot.slane %v1138, 5
      %v1141 = vor.u32 %v1137, %v1140
      %v1142 = vrot.slane %v1141, 4
      %v1144 = vshll.u32 %v823, 16
      %v1146 = vrot.slane %v1144, 5
      %v1147 = vsel %vm233, %v1142, %v1146
      %v1148 = vshrl.u32 %v823, 16
      %v1150 = vrot.slane %v1148, 4
      %v1151 = vor.u32 %v1150, %v1146
      %v1152 = vrot.slane %v1151, 4
      %v1154 = vshll.u32 %v842, 16
      %v1156 = vrot.slane %v1154, 5
      %v1157 = vsel %vm233, %v1152, %v1156
      %v1159 = vshrl.u32 %v824, 16
      %v1161 = vrot.slane %v1159, 4
      %v1162 = vshll.u32 %v824, 16
      %v1164 = vrot.slane %v1162, 5
      %v1165 = vor.u32 %v1161, %v1164
      %v1166 = vrot.slane %v1165, 4
      %v1168 = vshll.u32 %v825, 16
      %v1170 = vrot.slane %v1168, 5
      %v1171 = vsel %vm233, %v1166, %v1170
      %v1172 = vshrl.u32 %v825, 16
      %v1174 = vrot.slane %v1172, 4
      %v1175 = vor.u32 %v1174, %v1170
      %v1176 = vrot.slane %v1175, 4
      %v1178 = vshll.u32 %v843, 16
      %v1180 = vrot.slane %v1178, 5
      %v1181 = vsel %vm233, %v1176, %v1180
      %v1183 = vshrl.u32 %v826, 16
      %v1185 = vrot.slane %v1183, 4
      %v1186 = vshll.u32 %v826, 16
      %v1188 = vrot.slane %v1186, 5
      %v1189 = vor.u32 %v1185, %v1188
      %v1190 = vrot.slane %v1189, 4
      %v1192 = vshll.u32 %v827, 16
      %v1194 = vrot.slane %v1192, 5
      %v1195 = vsel %vm233, %v1190, %v1194
      %v1196 = vshrl.u32 %v827, 16
      %v1198 = vrot.slane %v1196, 4
      %v1199 = vor.u32 %v1198, %v1194
      %v1200 = vrot.slane %v1199, 4
      %v1202 = vshll.u32 %v844, 16
      %v1204 = vrot.slane %v1202, 5
      %v1205 = vsel %vm233, %v1200, %v1204
      %v1207 = vshrl.u32 %v828, 16
      %v1209 = vrot.slane %v1207, 4
      %v1210 = vshll.u32 %v828, 16
      %v1212 = vrot.slane %v1210, 5
      %v1213 = vor.u32 %v1209, %v1212
      %v1214 = vrot.slane %v1213, 4
      %v1216 = vshll.u32 %v829, 16
      %v1218 = vrot.slane %v1216, 5
      %v1219 = vsel %vm233, %v1214, %v1218
      %v1220 = vshrl.u32 %v829, 16
      %v1222 = vrot.slane %v1220, 4
      %v1223 = vor.u32 %v1222, %v1218
      %v1224 = vrot.slane %v1223, 4
      %v1226 = vshll.u32 %v845, 16
      %v1228 = vrot.slane %v1226, 5
      %v1229 = vsel %vm233, %v1224, %v1228
      %v1230 = vld [vmem:[%s797] sm:$0xe]
      %v1231 = vld [vmem:[%s797 + $0xc] sm:$0xe]
      %v1232 = vld [vmem:[%s797 + $0x18] sm:$0xe]
      %v1233 = vld [vmem:[%s797 + $0x24] sm:$0xe]
      %v1234 = vld [vmem:[%s797 + $0x30] sm:$0xe]
      %v1235 = vld [vmem:[%s797 + $0x3c] sm:$0xe]
      %v1236 = vld [vmem:[%s797 + $0x48] sm:$0xe]
      %v1237 = vld [vmem:[%s797 + $0x54] sm:$0xe]
      %v1238 = vld [vmem:[%s797 + $0x60] sm:$0xe]
      %v1239 = vld [vmem:[%s797 + $0x6c] sm:$0xe]
      %v1240 = vld [vmem:[%s797 + $0x78] sm:$0xe]
      %v1241 = vld [vmem:[%s797 + $0x84] sm:$0xe]
      %v1242 = vld [vmem:[%s797 + $0x90] sm:$0xe]
      %v1243 = vld [vmem:[%s797 + $0x9c] sm:$0xe]
      %v1244 = vld [vmem:[%s797 + $0xa8] sm:$0xe]
      %v1245 = vld [vmem:[%s797 + $0xb4] sm:$0xe]
      %v1294 = vrot.slane %v1230, 5
      %v1295 = vrot.slane %v1294, 4
      %v1296 = vrot.slane %v799, 5
      %v1297 = vsel %vm684, %v1295, %v1296
      %v1298 = vrot.slane %v1296, 4
      %v1299 = vrot.slane %v830, 5
      %v1300 = vsel %vm684, %v1298, %v1299
      %v1301 = vrot.slane %v1231, 5
      %v1302 = vrot.slane %v1301, 4
      %v1303 = vrot.slane %v801, 5
      %v1304 = vsel %vm684, %v1302, %v1303
      %v1305 = vrot.slane %v1303, 4
      %v1306 = vrot.slane %v831, 5
      %v1307 = vsel %vm684, %v1305, %v1306
      %v1308 = vrot.slane %v1232, 5
      %v1309 = vrot.slane %v1308, 4
      %v1310 = vrot.slane %v803, 5
      %v1311 = vsel %vm684, %v1309, %v1310
      %v1312 = vrot.slane %v1310, 4
      %v1313 = vrot.slane %v832, 5
      %v1314 = vsel %vm684, %v1312, %v1313
      %v1315 = vrot.slane %v1233, 5
      %v1316 = vrot.slane %v1315, 4
      %v1317 = vrot.slane %v805, 5
      %v1318 = vsel %vm684, %v1316, %v1317
      %v1319 = vrot.slane %v1317, 4
      %v1320 = vrot.slane %v833, 5
      %v1321 = vsel %vm684, %v1319, %v1320
      %v1322 = vrot.slane %v1234, 5
      %v1323 = vrot.slane %v1322, 4
      %v1324 = vrot.slane %v807, 5
      %v1325 = vsel %vm684, %v1323, %v1324
      %v1326 = vrot.slane %v1324, 4
      %v1327 = vrot.slane %v834, 5
      %v1328 = vsel %vm684, %v1326, %v1327
      %v1329 = vrot.slane %v1235, 5
      %v1330 = vrot.slane %v1329, 4
      %v1331 = vrot.slane %v809, 5
      %v1332 = vsel %vm684, %v1330, %v1331
      %v1333 = vrot.slane %v1331, 4
      %v1334 = vrot.slane %v835, 5
      %v1335 = vsel %vm684, %v1333, %v1334
      %v1336 = vrot.slane %v1236, 5
      %v1337 = vrot.slane %v1336, 4
      %v1338 = vrot.slane %v811, 5
      %v1339 = vsel %vm684, %v1337, %v1338
      %v1340 = vrot.slane %v1338, 4
      %v1341 = vrot.slane %v836, 5
      %v1342 = vsel %vm684, %v1340, %v1341
      %v1343 = vrot.slane %v1237, 5
      %v1344 = vrot.slane %v1343, 4
      %v1345 = vrot.slane %v813, 5
      %v1346 = vsel %vm684, %v1344, %v1345
      %v1347 = vrot.slane %v1345, 4
      %v1348 = vrot.slane %v837, 5
      %v1349 = vsel %vm684, %v1347, %v1348
      %v1350 = vrot.slane %v1238, 5
      %v1351 = vrot.slane %v1350, 4
      %v1352 = vrot.slane %v815, 5
      %v1353 = vsel %vm684, %v1351, %v1352
      %v1354 = vrot.slane %v1352, 4
      %v1355 = vrot.slane %v838, 5
      %v1356 = vsel %vm684, %v1354, %v1355
      %v1357 = vrot.slane %v1239, 5
      %v1358 = vrot.slane %v1357, 4
      %v1359 = vrot.slane %v817, 5
      %v1360 = vsel %vm684, %v1358, %v1359
      %v1361 = vrot.slane %v1359, 4
      %v1362 = vrot.slane %v839, 5
      %v1363 = vsel %vm684, %v1361, %v1362
      %v1364 = vrot.slane %v1240, 5
      %v1365 = vrot.slane %v1364, 4
      %v1366 = vrot.slane %v819, 5
      %v1367 = vsel %vm684, %v1365, %v1366
      %v1368 = vrot.slane %v1366, 4
      %v1369 = vrot.slane %v840, 5
      %v1370 = vsel %vm684, %v1368, %v1369
      %v1371 = vrot.slane %v1241, 5
      %v1372 = vrot.slane %v1371, 4
      %v1373 = vrot.slane %v821, 5
      %v1374 = vsel %vm684, %v1372, %v1373
      %v1375 = vrot.slane %v1373, 4
      %v1376 = vrot.slane %v841, 5
      %v1377 = vsel %vm684, %v1375, %v1376
      %v1378 = vrot.slane %v1242, 5
      %v1379 = vrot.slane %v1378, 4
      %v1380 = vrot.slane %v823, 5
      %v1381 = vsel %vm684, %v1379, %v1380
      %v1382 = vrot.slane %v1380, 4
      %v1383 = vrot.slane %v842, 5
      %v1384 = vsel %vm684, %v1382, %v1383
      %v1385 = vrot.slane %v1243, 5
      %v1386 = vrot.slane %v1385, 4
      %v1387 = vrot.slane %v825, 5
      %v1388 = vsel %vm684, %v1386, %v1387
      %v1389 = vrot.slane %v1387, 4
      %v1390 = vrot.slane %v843, 5
      %v1391 = vsel %vm684, %v1389, %v1390
      %v1392 = vrot.slane %v1244, 5
      %v1393 = vrot.slane %v1392, 4
      %v1394 = vrot.slane %v827, 5
      %v1395 = vsel %vm684, %v1393, %v1394
      %v1396 = vrot.slane %v1394, 4
      %v1397 = vrot.slane %v844, 5
      %v1398 = vsel %vm684, %v1396, %v1397
      %v1399 = vrot.slane %v1245, 5
      %v1400 = vrot.slane %v1399, 4
      %v1401 = vrot.slane %v829, 5
      %v1402 = vsel %vm684, %v1400, %v1401
      %v1403 = vrot.slane %v1401, 4
      %v1404 = vrot.slane %v845, 5
      %v1405 = vsel %vm684, %v1403, %v1404
      %s1406 = scalar_lea.vmem %s172, 24
      %v1407 = vld [vmem:[%s1406] sm:$0xf]
      %v1408 = vld [vmem:[%s1406 + $0x4] sm:$0xf]
      %v1409 = vld [vmem:[%s1406 + $0xc] sm:$0xf]
      %v1410 = vld [vmem:[%s1406 + $0x10] sm:$0xf]
      %v1411 = vld [vmem:[%s1406 + $0x18] sm:$0xf]
      %v1412 = vld [vmem:[%s1406 + $0x1c] sm:$0xf]
      %v1413 = vld [vmem:[%s1406 + $0x24] sm:$0xf]
      %v1414 = vld [vmem:[%s1406 + $0x28] sm:$0xf]
      %v1415 = vld [vmem:[%s1406 + $0x30] sm:$0xf]
      %v1416 = vld [vmem:[%s1406 + $0x34] sm:$0xf]
      %v1417 = vld [vmem:[%s1406 + $0x3c] sm:$0xf]
      %v1418 = vld [vmem:[%s1406 + $0x40] sm:$0xf]
      %v1419 = vld [vmem:[%s1406 + $0x48] sm:$0xf]
      %v1420 = vld [vmem:[%s1406 + $0x4c] sm:$0xf]
      %v1421 = vld [vmem:[%s1406 + $0x54] sm:$0xf]
      %v1422 = vld [vmem:[%s1406 + $0x58] sm:$0xf]
      %v1423 = vld [vmem:[%s1406 + $0x60] sm:$0xf]
      %v1424 = vld [vmem:[%s1406 + $0x64] sm:$0xf]
      %v1425 = vld [vmem:[%s1406 + $0x6c] sm:$0xf]
      %v1426 = vld [vmem:[%s1406 + $0x70] sm:$0xf]
      %v1427 = vld [vmem:[%s1406 + $0x78] sm:$0xf]
      %v1428 = vld [vmem:[%s1406 + $0x7c] sm:$0xf]
      %v1429 = vld [vmem:[%s1406 + $0x84] sm:$0xf]
      %v1430 = vld [vmem:[%s1406 + $0x88] sm:$0xf]
      %v1431 = vld [vmem:[%s1406 + $0x90] sm:$0xf]
      %v1432 = vld [vmem:[%s1406 + $0x94] sm:$0xf]
      %v1433 = vld [vmem:[%s1406 + $0x9c] sm:$0xf]
      %v1434 = vld [vmem:[%s1406 + $0xa0] sm:$0xf]
      %v1435 = vld [vmem:[%s1406 + $0xa8] sm:$0xf]
      %v1436 = vld [vmem:[%s1406 + $0xac] sm:$0xf]
      %v1437 = vld [vmem:[%s1406 + $0xb4] sm:$0xf]
      %v1438 = vld [vmem:[%s1406 + $0xb8] sm:$0xf]
      %v1439 = vld [vmem:[%s1406 + $0x8] sm:$0x1]
      %v1440 = vld [vmem:[%s1406 + $0x14] sm:$0x1]
      %v1441 = vld [vmem:[%s1406 + $0x20] sm:$0x1]
      %v1442 = vld [vmem:[%s1406 + $0x2c] sm:$0x1]
      %v1443 = vld [vmem:[%s1406 + $0x38] sm:$0x1]
      %v1444 = vld [vmem:[%s1406 + $0x44] sm:$0x1]
      %v1445 = vld [vmem:[%s1406 + $0x50] sm:$0x1]
      %v1446 = vld [vmem:[%s1406 + $0x5c] sm:$0x1]
      %v1447 = vld [vmem:[%s1406 + $0x68] sm:$0x1]
      %v1448 = vld [vmem:[%s1406 + $0x74] sm:$0x1]
      %v1449 = vld [vmem:[%s1406 + $0x80] sm:$0x1]
      %v1450 = vld [vmem:[%s1406 + $0x8c] sm:$0x1]
      %v1451 = vld [vmem:[%s1406 + $0x98] sm:$0x1]
      %v1452 = vld [vmem:[%s1406 + $0xa4] sm:$0x1]
      %v1453 = vld [vmem:[%s1406 + $0xb0] sm:$0x1]
      %v1454 = vld [vmem:[%s1406 + $0xbc] sm:$0x1]
      %v1456 = vshrl.u32 %v1407, 16
      %v1458 = vrot.slane %v1456, 4
      %v1459 = vshll.u32 %v1407, 16
      %v1461 = vrot.slane %v1459, 5
      %v1462 = vor.u32 %v1458, %v1461
      %v1463 = vrot.slane %v1462, 4
      %v1465 = vshll.u32 %v1408, 16
      %v1467 = vrot.slane %v1465, 5
      %v1468 = vsel %vm233, %v1463, %v1467
      %v1469 = vshrl.u32 %v1408, 16
      %v1471 = vrot.slane %v1469, 4
      %v1472 = vor.u32 %v1471, %v1467
      %v1473 = vrot.slane %v1472, 4
      %v1475 = vshll.u32 %v1439, 16
      %v1477 = vrot.slane %v1475, 5
      %v1478 = vsel %vm233, %v1473, %v1477
      %v1480 = vshrl.u32 %v1409, 16
      %v1482 = vrot.slane %v1480, 4
      %v1483 = vshll.u32 %v1409, 16
      %v1485 = vrot.slane %v1483, 5
      %v1486 = vor.u32 %v1482, %v1485
      %v1487 = vrot.slane %v1486, 4
      %v1489 = vshll.u32 %v1410, 16
      %v1491 = vrot.slane %v1489, 5
      %v1492 = vsel %vm233, %v1487, %v1491
      %v1493 = vshrl.u32 %v1410, 16
      %v1495 = vrot.slane %v1493, 4
      %v1496 = vor.u32 %v1495, %v1491
      %v1497 = vrot.slane %v1496, 4
      %v1499 = vshll.u32 %v1440, 16
      %v1501 = vrot.slane %v1499, 5
      %v1502 = vsel %vm233, %v1497, %v1501
      %v1504 = vshrl.u32 %v1411, 16
      %v1506 = vrot.slane %v1504, 4
      %v1507 = vshll.u32 %v1411, 16
      %v1509 = vrot.slane %v1507, 5
      %v1510 = vor.u32 %v1506, %v1509
      %v1511 = vrot.slane %v1510, 4
      %v1513 = vshll.u32 %v1412, 16
      %v1515 = vrot.slane %v1513, 5
      %v1516 = vsel %vm233, %v1511, %v1515
      %v1517 = vshrl.u32 %v1412, 16
      %v1519 = vrot.slane %v1517, 4
      %v1520 = vor.u32 %v1519, %v1515
      %v1521 = vrot.slane %v1520, 4
      %v1523 = vshll.u32 %v1441, 16
      %v1525 = vrot.slane %v1523, 5
      %v1526 = vsel %vm233, %v1521, %v1525
      %v1528 = vshrl.u32 %v1413, 16
      %v1530 = vrot.slane %v1528, 4
      %v1531 = vshll.u32 %v1413, 16
      %v1533 = vrot.slane %v1531, 5
      %v1534 = vor.u32 %v1530, %v1533
      %v1535 = vrot.slane %v1534, 4
      %v1537 = vshll.u32 %v1414, 16
      %v1539 = vrot.slane %v1537, 5
      %v1540 = vsel %vm233, %v1535, %v1539
      %v1541 = vshrl.u32 %v1414, 16
      %v1543 = vrot.slane %v1541, 4
      %v1544 = vor.u32 %v1543, %v1539
      %v1545 = vrot.slane %v1544, 4
      %v1547 = vshll.u32 %v1442, 16
      %v1549 = vrot.slane %v1547, 5
      %v1550 = vsel %vm233, %v1545, %v1549
      %v1552 = vshrl.u32 %v1415, 16
      %v1554 = vrot.slane %v1552, 4
      %v1555 = vshll.u32 %v1415, 16
      %v1557 = vrot.slane %v1555, 5
      %v1558 = vor.u32 %v1554, %v1557
      %v1559 = vrot.slane %v1558, 4
      %v1561 = vshll.u32 %v1416, 16
      %v1563 = vrot.slane %v1561, 5
      %v1564 = vsel %vm233, %v1559, %v1563
      %v1565 = vshrl.u32 %v1416, 16
      %v1567 = vrot.slane %v1565, 4
      %v1568 = vor.u32 %v1567, %v1563
      %v1569 = vrot.slane %v1568, 4
      %v1571 = vshll.u32 %v1443, 16
      %v1573 = vrot.slane %v1571, 5
      %v1574 = vsel %vm233, %v1569, %v1573
      %v1576 = vshrl.u32 %v1417, 16
      %v1578 = vrot.slane %v1576, 4
      %v1579 = vshll.u32 %v1417, 16
      %v1581 = vrot.slane %v1579, 5
      %v1582 = vor.u32 %v1578, %v1581
      %v1583 = vrot.slane %v1582, 4
      %v1585 = vshll.u32 %v1418, 16
      %v1587 = vrot.slane %v1585, 5
      %v1588 = vsel %vm233, %v1583, %v1587
      %v1589 = vshrl.u32 %v1418, 16
      %v1591 = vrot.slane %v1589, 4
      %v1592 = vor.u32 %v1591, %v1587
      %v1593 = vrot.slane %v1592, 4
      %v1595 = vshll.u32 %v1444, 16
      %v1597 = vrot.slane %v1595, 5
      %v1598 = vsel %vm233, %v1593, %v1597
      %v1600 = vshrl.u32 %v1419, 16
      %v1602 = vrot.slane %v1600, 4
      %v1603 = vshll.u32 %v1419, 16
      %v1605 = vrot.slane %v1603, 5
      %v1606 = vor.u32 %v1602, %v1605
      %v1607 = vrot.slane %v1606, 4
      %v1609 = vshll.u32 %v1420, 16
      %v1611 = vrot.slane %v1609, 5
      %v1612 = vsel %vm233, %v1607, %v1611
      %v1613 = vshrl.u32 %v1420, 16
      %v1615 = vrot.slane %v1613, 4
      %v1616 = vor.u32 %v1615, %v1611
      %v1617 = vrot.slane %v1616, 4
      %v1619 = vshll.u32 %v1445, 16
      %v1621 = vrot.slane %v1619, 5
      %v1622 = vsel %vm233, %v1617, %v1621
      %v1624 = vshrl.u32 %v1421, 16
      %v1626 = vrot.slane %v1624, 4
      %v1627 = vshll.u32 %v1421, 16
      %v1629 = vrot.slane %v1627, 5
      %v1630 = vor.u32 %v1626, %v1629
      %v1631 = vrot.slane %v1630, 4
      %v1633 = vshll.u32 %v1422, 16
      %v1635 = vrot.slane %v1633, 5
      %v1636 = vsel %vm233, %v1631, %v1635
      %v1637 = vshrl.u32 %v1422, 16
      %v1639 = vrot.slane %v1637, 4
      %v1640 = vor.u32 %v1639, %v1635
      %v1641 = vrot.slane %v1640, 4
      %v1643 = vshll.u32 %v1446, 16
      %v1645 = vrot.slane %v1643, 5
      %v1646 = vsel %vm233, %v1641, %v1645
      %v1648 = vshrl.u32 %v1423, 16
      %v1650 = vrot.slane %v1648, 4
      %v1651 = vshll.u32 %v1423, 16
      %v1653 = vrot.slane %v1651, 5
      %v1654 = vor.u32 %v1650, %v1653
      %v1655 = vrot.slane %v1654, 4
      %v1657 = vshll.u32 %v1424, 16
      %v1659 = vrot.slane %v1657, 5
      %v1660 = vsel %vm233, %v1655, %v1659
      %v1661 = vshrl.u32 %v1424, 16
      %v1663 = vrot.slane %v1661, 4
      %v1664 = vor.u32 %v1663, %v1659
      %v1665 = vrot.slane %v1664, 4
      %v1667 = vshll.u32 %v1447, 16
      %v1669 = vrot.slane %v1667, 5
      %v1670 = vsel %vm233, %v1665, %v1669
      %v1672 = vshrl.u32 %v1425, 16
      %v1674 = vrot.slane %v1672, 4
      %v1675 = vshll.u32 %v1425, 16
      %v1677 = vrot.slane %v1675, 5
      %v1678 = vor.u32 %v1674, %v1677
      %v1679 = vrot.slane %v1678, 4
      %v1681 = vshll.u32 %v1426, 16
      %v1683 = vrot.slane %v1681, 5
      %v1684 = vsel %vm233, %v1679, %v1683
      %v1685 = vshrl.u32 %v1426, 16
      %v1687 = vrot.slane %v1685, 4
      %v1688 = vor.u32 %v1687, %v1683
      %v1689 = vrot.slane %v1688, 4
      %v1691 = vshll.u32 %v1448, 16
      %v1693 = vrot.slane %v1691, 5
      %v1694 = vsel %vm233, %v1689, %v1693
      %v1696 = vshrl.u32 %v1427, 16
      %v1698 = vrot.slane %v1696, 4
      %v1699 = vshll.u32 %v1427, 16
      %v1701 = vrot.slane %v1699, 5
      %v1702 = vor.u32 %v1698, %v1701
      %v1703 = vrot.slane %v1702, 4
      %v1705 = vshll.u32 %v1428, 16
      %v1707 = vrot.slane %v1705, 5
      %v1708 = vsel %vm233, %v1703, %v1707
      %v1709 = vshrl.u32 %v1428, 16
      %v1711 = vrot.slane %v1709, 4
      %v1712 = vor.u32 %v1711, %v1707
      %v1713 = vrot.slane %v1712, 4
      %v1715 = vshll.u32 %v1449, 16
      %v1717 = vrot.slane %v1715, 5
      %v1718 = vsel %vm233, %v1713, %v1717
      %v1720 = vshrl.u32 %v1429, 16
      %v1722 = vrot.slane %v1720, 4
      %v1723 = vshll.u32 %v1429, 16
      %v1725 = vrot.slane %v1723, 5
      %v1726 = vor.u32 %v1722, %v1725
      %v1727 = vrot.slane %v1726, 4
      %v1729 = vshll.u32 %v1430, 16
      %v1731 = vrot.slane %v1729, 5
      %v1732 = vsel %vm233, %v1727, %v1731
      %v1733 = vshrl.u32 %v1430, 16
      %v1735 = vrot.slane %v1733, 4
      %v1736 = vor.u32 %v1735, %v1731
      %v1737 = vrot.slane %v1736, 4
      %v1739 = vshll.u32 %v1450, 16
      %v1741 = vrot.slane %v1739, 5
      %v1742 = vsel %vm233, %v1737, %v1741
      %v1744 = vshrl.u32 %v1431, 16
      %v1746 = vrot.slane %v1744, 4
      %v1747 = vshll.u32 %v1431, 16
      %v1749 = vrot.slane %v1747, 5
      %v1750 = vor.u32 %v1746, %v1749
      %v1751 = vrot.slane %v1750, 4
      %v1753 = vshll.u32 %v1432, 16
      %v1755 = vrot.slane %v1753, 5
      %v1756 = vsel %vm233, %v1751, %v1755
      %v1757 = vshrl.u32 %v1432, 16
      %v1759 = vrot.slane %v1757, 4
      %v1760 = vor.u32 %v1759, %v1755
      %v1761 = vrot.slane %v1760, 4
      %v1763 = vshll.u32 %v1451, 16
      %v1765 = vrot.slane %v1763, 5
      %v1766 = vsel %vm233, %v1761, %v1765
      %v1768 = vshrl.u32 %v1433, 16
      %v1770 = vrot.slane %v1768, 4
      %v1771 = vshll.u32 %v1433, 16
      %v1773 = vrot.slane %v1771, 5
      %v1774 = vor.u32 %v1770, %v1773
      %v1775 = vrot.slane %v1774, 4
      %v1777 = vshll.u32 %v1434, 16
      %v1779 = vrot.slane %v1777, 5
      %v1780 = vsel %vm233, %v1775, %v1779
      %v1781 = vshrl.u32 %v1434, 16
      %v1783 = vrot.slane %v1781, 4
      %v1784 = vor.u32 %v1783, %v1779
      %v1785 = vrot.slane %v1784, 4
      %v1787 = vshll.u32 %v1452, 16
      %v1789 = vrot.slane %v1787, 5
      %v1790 = vsel %vm233, %v1785, %v1789
      %v1792 = vshrl.u32 %v1435, 16
      %v1794 = vrot.slane %v1792, 4
      %v1795 = vshll.u32 %v1435, 16
      %v1797 = vrot.slane %v1795, 5
      %v1798 = vor.u32 %v1794, %v1797
      %v1799 = vrot.slane %v1798, 4
      %v1801 = vshll.u32 %v1436, 16
      %v1803 = vrot.slane %v1801, 5
      %v1804 = vsel %vm233, %v1799, %v1803
      %v1805 = vshrl.u32 %v1436, 16
      %v1807 = vrot.slane %v1805, 4
      %v1808 = vor.u32 %v1807, %v1803
      %v1809 = vrot.slane %v1808, 4
      %v1811 = vshll.u32 %v1453, 16
      %v1813 = vrot.slane %v1811, 5
      %v1814 = vsel %vm233, %v1809, %v1813
      %v1816 = vshrl.u32 %v1437, 16
      %v1818 = vrot.slane %v1816, 4
      %v1819 = vshll.u32 %v1437, 16
      %v1821 = vrot.slane %v1819, 5
      %v1822 = vor.u32 %v1818, %v1821
      %v1823 = vrot.slane %v1822, 4
      %v1825 = vshll.u32 %v1438, 16
      %v1827 = vrot.slane %v1825, 5
      %v1828 = vsel %vm233, %v1823, %v1827
      %v1829 = vshrl.u32 %v1438, 16
      %v1831 = vrot.slane %v1829, 4
      %v1832 = vor.u32 %v1831, %v1827
      %v1833 = vrot.slane %v1832, 4
      %v1835 = vshll.u32 %v1454, 16
      %v1837 = vrot.slane %v1835, 5
      %v1838 = vsel %vm233, %v1833, %v1837
      %v1839 = vld [vmem:[%s1406] sm:$0xe]
      %v1840 = vld [vmem:[%s1406 + $0xc] sm:$0xe]
      %v1841 = vld [vmem:[%s1406 + $0x18] sm:$0xe]
      %v1842 = vld [vmem:[%s1406 + $0x24] sm:$0xe]
      %v1843 = vld [vmem:[%s1406 + $0x30] sm:$0xe]
      %v1844 = vld [vmem:[%s1406 + $0x3c] sm:$0xe]
      %v1845 = vld [vmem:[%s1406 + $0x48] sm:$0xe]
      %v1846 = vld [vmem:[%s1406 + $0x54] sm:$0xe]
      %v1847 = vld [vmem:[%s1406 + $0x60] sm:$0xe]
      %v1848 = vld [vmem:[%s1406 + $0x6c] sm:$0xe]
      %v1849 = vld [vmem:[%s1406 + $0x78] sm:$0xe]
      %v1850 = vld [vmem:[%s1406 + $0x84] sm:$0xe]
      %v1851 = vld [vmem:[%s1406 + $0x90] sm:$0xe]
      %v1852 = vld [vmem:[%s1406 + $0x9c] sm:$0xe]
      %v1853 = vld [vmem:[%s1406 + $0xa8] sm:$0xe]
      %v1854 = vld [vmem:[%s1406 + $0xb4] sm:$0xe]
      %v1903 = vrot.slane %v1839, 5
      %v1904 = vrot.slane %v1903, 4
      %v1905 = vrot.slane %v1408, 5
      %v1906 = vsel %vm684, %v1904, %v1905
      %v1907 = vrot.slane %v1905, 4
      %v1908 = vrot.slane %v1439, 5
      %v1909 = vsel %vm684, %v1907, %v1908
      %v1910 = vrot.slane %v1840, 5
      %v1911 = vrot.slane %v1910, 4
      %v1912 = vrot.slane %v1410, 5
      %v1913 = vsel %vm684, %v1911, %v1912
      %v1914 = vrot.slane %v1912, 4
      %v1915 = vrot.slane %v1440, 5
      %v1916 = vsel %vm684, %v1914, %v1915
      %v1917 = vrot.slane %v1841, 5
      %v1918 = vrot.slane %v1917, 4
      %v1919 = vrot.slane %v1412, 5
      %v1920 = vsel %vm684, %v1918, %v1919
      %v1921 = vrot.slane %v1919, 4
      %v1922 = vrot.slane %v1441, 5
      %v1923 = vsel %vm684, %v1921, %v1922
      %v1924 = vrot.slane %v1842, 5
      %v1925 = vrot.slane %v1924, 4
      %v1926 = vrot.slane %v1414, 5
      %v1927 = vsel %vm684, %v1925, %v1926
      %v1928 = vrot.slane %v1926, 4
      %v1929 = vrot.slane %v1442, 5
      %v1930 = vsel %vm684, %v1928, %v1929
      %v1931 = vrot.slane %v1843, 5
      %v1932 = vrot.slane %v1931, 4
      %v1933 = vrot.slane %v1416, 5
      %v1934 = vsel %vm684, %v1932, %v1933
      %v1935 = vrot.slane %v1933, 4
      %v1936 = vrot.slane %v1443, 5
      %v1937 = vsel %vm684, %v1935, %v1936
      %v1938 = vrot.slane %v1844, 5
      %v1939 = vrot.slane %v1938, 4
      %v1940 = vrot.slane %v1418, 5
      %v1941 = vsel %vm684, %v1939, %v1940
      %v1942 = vrot.slane %v1940, 4
      %v1943 = vrot.slane %v1444, 5
      %v1944 = vsel %vm684, %v1942, %v1943
      %v1945 = vrot.slane %v1845, 5
      %v1946 = vrot.slane %v1945, 4
      %v1947 = vrot.slane %v1420, 5
      %v1948 = vsel %vm684, %v1946, %v1947
      %v1949 = vrot.slane %v1947, 4
      %v1950 = vrot.slane %v1445, 5
      %v1951 = vsel %vm684, %v1949, %v1950
      %v1952 = vrot.slane %v1846, 5
      %v1953 = vrot.slane %v1952, 4
      %v1954 = vrot.slane %v1422, 5
      %v1955 = vsel %vm684, %v1953, %v1954
      %v1956 = vrot.slane %v1954, 4
      %v1957 = vrot.slane %v1446, 5
      %v1958 = vsel %vm684, %v1956, %v1957
      %v1959 = vrot.slane %v1847, 5
      %v1960 = vrot.slane %v1959, 4
      %v1961 = vrot.slane %v1424, 5
      %v1962 = vsel %vm684, %v1960, %v1961
      %v1963 = vrot.slane %v1961, 4
      %v1964 = vrot.slane %v1447, 5
      %v1965 = vsel %vm684, %v1963, %v1964
      %v1966 = vrot.slane %v1848, 5
      %v1967 = vrot.slane %v1966, 4
      %v1968 = vrot.slane %v1426, 5
      %v1969 = vsel %vm684, %v1967, %v1968
      %v1970 = vrot.slane %v1968, 4
      %v1971 = vrot.slane %v1448, 5
      %v1972 = vsel %vm684, %v1970, %v1971
      %v1973 = vrot.slane %v1849, 5
      %v1974 = vrot.slane %v1973, 4
      %v1975 = vrot.slane %v1428, 5
      %v1976 = vsel %vm684, %v1974, %v1975
      %v1977 = vrot.slane %v1975, 4
      %v1978 = vrot.slane %v1449, 5
      %v1979 = vsel %vm684, %v1977, %v1978
      %v1980 = vrot.slane %v1850, 5
      %v1981 = vrot.slane %v1980, 4
      %v1982 = vrot.slane %v1430, 5
      %v1983 = vsel %vm684, %v1981, %v1982
      %v1984 = vrot.slane %v1982, 4
      %v1985 = vrot.slane %v1450, 5
      %v1986 = vsel %vm684, %v1984, %v1985
      %v1987 = vrot.slane %v1851, 5
      %v1988 = vrot.slane %v1987, 4
      %v1989 = vrot.slane %v1432, 5
      %v1990 = vsel %vm684, %v1988, %v1989
      %v1991 = vrot.slane %v1989, 4
      %v1992 = vrot.slane %v1451, 5
      %v1993 = vsel %vm684, %v1991, %v1992
      %v1994 = vrot.slane %v1852, 5
      %v1995 = vrot.slane %v1994, 4
      %v1996 = vrot.slane %v1434, 5
      %v1997 = vsel %vm684, %v1995, %v1996
      %v1998 = vrot.slane %v1996, 4
      %v1999 = vrot.slane %v1452, 5
      %v2000 = vsel %vm684, %v1998, %v1999
      %v2001 = vrot.slane %v1853, 5
      %v2002 = vrot.slane %v2001, 4
      %v2003 = vrot.slane %v1436, 5
      %v2004 = vsel %vm684, %v2002, %v2003
      %v2005 = vrot.slane %v2003, 4
      %v2006 = vrot.slane %v1453, 5
      %v2007 = vsel %vm684, %v2005, %v2006
      %v2008 = vrot.slane %v1854, 5
      %v2009 = vrot.slane %v2008, 4
      %v2010 = vrot.slane %v1438, 5
      %v2011 = vsel %vm684, %v2009, %v2010
      %v2012 = vrot.slane %v2010, 4
      %v2013 = vrot.slane %v1454, 5
      %v2014 = vsel %vm684, %v2012, %v2013
      %v2031 = vunpack.c.l.b16 %v183
      %v2032 = vunpack.c.l.b16 %v184
      %v2033 = vunpack.c.l.b16 %v185
      %v2034 = vunpack.c.l.b16 %v186
      %v2035 = vunpack.c.l.b16 %v187
      %v2036 = vunpack.c.l.b16 %v188
      %v2037 = vunpack.c.l.b16 %v189
      %v2038 = vunpack.c.l.b16 %v190
      %v2039 = vunpack.c.l.b16 %v191
      %v2040 = vunpack.c.l.b16 %v192
      %v2041 = vunpack.c.l.b16 %v193
      %v2042 = vunpack.c.l.b16 %v194
      %v2043 = vunpack.c.l.b16 %v195
      %v2044 = vunpack.c.l.b16 %v196
      %v2045 = vunpack.c.l.b16 %v197
      %v2046 = vunpack.c.l.b16 %v198
      %v2047 = vunpack.c.l.b16 %v199
      %v2048 = vunpack.c.l.b16 %v200
      %v2049 = vunpack.c.l.b16 %v201
      %v2050 = vunpack.c.l.b16 %v202
      %v2051 = vunpack.c.l.b16 %v203
      %v2052 = vunpack.c.l.b16 %v204
      %v2053 = vunpack.c.l.b16 %v205
      %v2054 = vunpack.c.l.b16 %v206
      %v2055 = vunpack.c.l.b16 %v207
      %v2056 = vunpack.c.l.b16 %v208
      %v2057 = vunpack.c.l.b16 %v209
      %v2058 = vunpack.c.l.b16 %v210
      %v2059 = vunpack.c.l.b16 %v211
      %v2060 = vunpack.c.l.b16 %v212
      %v2061 = vunpack.c.l.b16 %v213
      %v2062 = vunpack.c.l.b16 %v214
      %v2063 = vpack.c.b16 %v2032, %v2031
      %v2064 = vpack.c.b16 %v2034, %v2033
      %v2065 = vpack.c.b16 %v2036, %v2035
      %v2066 = vpack.c.b16 %v2038, %v2037
      %v2067 = vpack.c.b16 %v2040, %v2039
      %v2068 = vpack.c.b16 %v2042, %v2041
      %v2069 = vpack.c.b16 %v2044, %v2043
      %v2070 = vpack.c.b16 %v2046, %v2045
      %v2071 = vpack.c.b16 %v2048, %v2047
      %v2072 = vpack.c.b16 %v2050, %v2049
      %v2073 = vpack.c.b16 %v2052, %v2051
      %v2074 = vpack.c.b16 %v2054, %v2053
      %v2075 = vpack.c.b16 %v2056, %v2055
      %v2076 = vpack.c.b16 %v2058, %v2057
      %v2077 = vpack.c.b16 %v2060, %v2059
      %v2078 = vpack.c.b16 %v2062, %v2061
      %v2079 = vunpack.c.l.b16 %v247
      %v2080 = vunpack.c.l.b16 %v257
      %v2081 = vunpack.c.l.b16 %v271
      %v2082 = vunpack.c.l.b16 %v281
      %v2083 = vunpack.c.l.b16 %v295
      %v2084 = vunpack.c.l.b16 %v305
      %v2085 = vunpack.c.l.b16 %v319
      %v2086 = vunpack.c.l.b16 %v329
      %v2087 = vunpack.c.l.b16 %v343
      %v2088 = vunpack.c.l.b16 %v353
      %v2089 = vunpack.c.l.b16 %v367
      %v2090 = vunpack.c.l.b16 %v377
      %v2091 = vunpack.c.l.b16 %v391
      %v2092 = vunpack.c.l.b16 %v401
      %v2093 = vunpack.c.l.b16 %v415
      %v2094 = vunpack.c.l.b16 %v425
      %v2095 = vunpack.c.l.b16 %v439
      %v2096 = vunpack.c.l.b16 %v449
      %v2097 = vunpack.c.l.b16 %v463
      %v2098 = vunpack.c.l.b16 %v473
      %v2099 = vunpack.c.l.b16 %v487
      %v2100 = vunpack.c.l.b16 %v497
      %v2101 = vunpack.c.l.b16 %v511
      %v2102 = vunpack.c.l.b16 %v521
      %v2103 = vunpack.c.l.b16 %v535
      %v2104 = vunpack.c.l.b16 %v545
      %v2105 = vunpack.c.l.b16 %v559
      %v2106 = vunpack.c.l.b16 %v569
      %v2107 = vunpack.c.l.b16 %v583
      %v2108 = vunpack.c.l.b16 %v593
      %v2109 = vunpack.c.l.b16 %v607
      %v2110 = vunpack.c.l.b16 %v617
      %v2111 = vpack.c.b16 %v2080, %v2079
      %v2112 = vpack.c.b16 %v2082, %v2081
      %v2113 = vpack.c.b16 %v2084, %v2083
      %v2114 = vpack.c.b16 %v2086, %v2085
      %v2115 = vpack.c.b16 %v2088, %v2087
      %v2116 = vpack.c.b16 %v2090, %v2089
      %v2117 = vpack.c.b16 %v2092, %v2091
      %v2118 = vpack.c.b16 %v2094, %v2093
      %v2119 = vpack.c.b16 %v2096, %v2095
      %v2120 = vpack.c.b16 %v2098, %v2097
      %v2121 = vpack.c.b16 %v2100, %v2099
      %v2122 = vpack.c.b16 %v2102, %v2101
      %v2123 = vpack.c.b16 %v2104, %v2103
      %v2124 = vpack.c.b16 %v2106, %v2105
      %v2125 = vpack.c.b16 %v2108, %v2107
      %v2126 = vpack.c.b16 %v2110, %v2109
      %2127 = vrot.lane.b32.xlu0 %v2111, 4
      %v2128 = vpop.permute.xlu0 %2127
      %2129 = vrot.lane.b32.xlu0 %v2112, 4
      %v2130 = vpop.permute.xlu0 %2129
      %2131 = vrot.lane.b32.xlu0 %v2113, 4
      %v2132 = vpop.permute.xlu0 %2131
      %2133 = vrot.lane.b32.xlu0 %v2114, 4
      %v2134 = vpop.permute.xlu0 %2133
      %2135 = vrot.lane.b32.xlu0 %v2115, 4
      %v2136 = vpop.permute.xlu0 %2135
      %2137 = vrot.lane.b32.xlu0 %v2116, 4
      %v2138 = vpop.permute.xlu0 %2137
      %2139 = vrot.lane.b32.xlu0 %v2117, 4
      %v2140 = vpop.permute.xlu0 %2139
      %2141 = vrot.lane.b32.xlu0 %v2118, 4
      %v2142 = vpop.permute.xlu0 %2141
      %2143 = vrot.lane.b32.xlu0 %v2119, 4
      %v2144 = vpop.permute.xlu0 %2143
      %2145 = vrot.lane.b32.xlu0 %v2120, 4
      %v2146 = vpop.permute.xlu0 %2145
      %2147 = vrot.lane.b32.xlu0 %v2121, 4
      %v2148 = vpop.permute.xlu0 %2147
      %2149 = vrot.lane.b32.xlu0 %v2122, 4
      %v2150 = vpop.permute.xlu0 %2149
      %2151 = vrot.lane.b32.xlu0 %v2123, 4
      %v2152 = vpop.permute.xlu0 %2151
      %2153 = vrot.lane.b32.xlu0 %v2124, 4
      %v2154 = vpop.permute.xlu0 %2153
      %2155 = vrot.lane.b32.xlu0 %v2125, 4
      %v2156 = vpop.permute.xlu0 %2155
      %2157 = vrot.lane.b32.xlu0 %v2126, 4
      %v2158 = vpop.permute.xlu0 %2157
      %v2159 = vunpack.c.l.b16 %v688
      %v2160 = vunpack.c.l.b16 %v691
      %v2161 = vunpack.c.l.b16 %v695
      %v2162 = vunpack.c.l.b16 %v698
      %v2163 = vunpack.c.l.b16 %v702
      %v2164 = vunpack.c.l.b16 %v705
      %v2165 = vunpack.c.l.b16 %v709
      %v2166 = vunpack.c.l.b16 %v712
      %v2167 = vunpack.c.l.b16 %v716
      %v2168 = vunpack.c.l.b16 %v719
      %v2169 = vunpack.c.l.b16 %v723
      %v2170 = vunpack.c.l.b16 %v726
      %v2171 = vunpack.c.l.b16 %v730
      %v2172 = vunpack.c.l.b16 %v733
      %v2173 = vunpack.c.l.b16 %v737
      %v2174 = vunpack.c.l.b16 %v740
      %v2175 = vunpack.c.l.b16 %v744
      %v2176 = vunpack.c.l.b16 %v747
      %v2177 = vunpack.c.l.b16 %v751
      %v2178 = vunpack.c.l.b16 %v754
      %v2179 = vunpack.c.l.b16 %v758
      %v2180 = vunpack.c.l.b16 %v761
      %v2181 = vunpack.c.l.b16 %v765
      %v2182 = vunpack.c.l.b16 %v768
      %v2183 = vunpack.c.l.b16 %v772
      %v2184 = vunpack.c.l.b16 %v775
      %v2185 = vunpack.c.l.b16 %v779
      %v2186 = vunpack.c.l.b16 %v782
      %v2187 = vunpack.c.l.b16 %v786
      %v2188 = vunpack.c.l.b16 %v789
      %v2189 = vunpack.c.l.b16 %v793
      %v2190 = vunpack.c.l.b16 %v796
      %v2191 = vpack.c.b16 %v2160, %v2159
      %v2192 = vpack.c.b16 %v2162, %v2161
      %v2193 = vpack.c.b16 %v2164, %v2163
      %v2194 = vpack.c.b16 %v2166, %v2165
      %v2195 = vpack.c.b16 %v2168, %v2167
      %v2196 = vpack.c.b16 %v2170, %v2169
      %v2197 = vpack.c.b16 %v2172, %v2171
      %v2198 = vpack.c.b16 %v2174, %v2173
      %v2199 = vpack.c.b16 %v2176, %v2175
      %v2200 = vpack.c.b16 %v2178, %v2177
      %v2201 = vpack.c.b16 %v2180, %v2179
      %v2202 = vpack.c.b16 %v2182, %v2181
      %v2203 = vpack.c.b16 %v2184, %v2183
      %v2204 = vpack.c.b16 %v2186, %v2185
      %v2205 = vpack.c.b16 %v2188, %v2187
      %v2206 = vpack.c.b16 %v2190, %v2189
      %2207 = vrot.lane.b32.xlu0 %v2191, 8
      %v2208 = vpop.permute.xlu0 %2207
      %2209 = vrot.lane.b32.xlu0 %v2192, 8
      %v2210 = vpop.permute.xlu0 %2209
      %2211 = vrot.lane.b32.xlu0 %v2193, 8
      %v2212 = vpop.permute.xlu0 %2211
      %2213 = vrot.lane.b32.xlu0 %v2194, 8
      %v2214 = vpop.permute.xlu0 %2213
      %2215 = vrot.lane.b32.xlu0 %v2195, 8
      %v2216 = vpop.permute.xlu0 %2215
      %2217 = vrot.lane.b32.xlu0 %v2196, 8
      %v2218 = vpop.permute.xlu0 %2217
      %2219 = vrot.lane.b32.xlu0 %v2197, 8
      %v2220 = vpop.permute.xlu0 %2219
      %2221 = vrot.lane.b32.xlu0 %v2198, 8
      %v2222 = vpop.permute.xlu0 %2221
      %2223 = vrot.lane.b32.xlu0 %v2199, 8
      %v2224 = vpop.permute.xlu0 %2223
      %2225 = vrot.lane.b32.xlu0 %v2200, 8
      %v2226 = vpop.permute.xlu0 %2225
      %2227 = vrot.lane.b32.xlu0 %v2201, 8
      %v2228 = vpop.permute.xlu0 %2227
      %2229 = vrot.lane.b32.xlu0 %v2202, 8
      %v2230 = vpop.permute.xlu0 %2229
      %2231 = vrot.lane.b32.xlu0 %v2203, 8
      %v2232 = vpop.permute.xlu0 %2231
      %2233 = vrot.lane.b32.xlu0 %v2204, 8
      %v2234 = vpop.permute.xlu0 %2233
      %2235 = vrot.lane.b32.xlu0 %v2205, 8
      %v2236 = vpop.permute.xlu0 %2235
      %2237 = vrot.lane.b32.xlu0 %v2206, 8
      %v2238 = vpop.permute.xlu0 %2237
      %v2255 = vunpack.c.l.b16 %v798
      %v2256 = vunpack.c.l.b16 %v799
      %v2257 = vunpack.c.l.b16 %v800
      %v2258 = vunpack.c.l.b16 %v801
      %v2259 = vunpack.c.l.b16 %v802
      %v2260 = vunpack.c.l.b16 %v803
      %v2261 = vunpack.c.l.b16 %v804
      %v2262 = vunpack.c.l.b16 %v805
      %v2263 = vunpack.c.l.b16 %v806
      %v2264 = vunpack.c.l.b16 %v807
      %v2265 = vunpack.c.l.b16 %v808
      %v2266 = vunpack.c.l.b16 %v809
      %v2267 = vunpack.c.l.b16 %v810
      %v2268 = vunpack.c.l.b16 %v811
      %v2269 = vunpack.c.l.b16 %v812
      %v2270 = vunpack.c.l.b16 %v813
      %v2271 = vunpack.c.l.b16 %v814
      %v2272 = vunpack.c.l.b16 %v815
      %v2273 = vunpack.c.l.b16 %v816
      %v2274 = vunpack.c.l.b16 %v817
      %v2275 = vunpack.c.l.b16 %v818
      %v2276 = vunpack.c.l.b16 %v819
      %v2277 = vunpack.c.l.b16 %v820
      %v2278 = vunpack.c.l.b16 %v821
      %v2279 = vunpack.c.l.b16 %v822
      %v2280 = vunpack.c.l.b16 %v823
      %v2281 = vunpack.c.l.b16 %v824
      %v2282 = vunpack.c.l.b16 %v825
      %v2283 = vunpack.c.l.b16 %v826
      %v2284 = vunpack.c.l.b16 %v827
      %v2285 = vunpack.c.l.b16 %v828
      %v2286 = vunpack.c.l.b16 %v829
      %v2287 = vpack.c.b16 %v2256, %v2255
      %v2288 = vpack.c.b16 %v2258, %v2257
      %v2289 = vpack.c.b16 %v2260, %v2259
      %v2290 = vpack.c.b16 %v2262, %v2261
      %v2291 = vpack.c.b16 %v2264, %v2263
      %v2292 = vpack.c.b16 %v2266, %v2265
      %v2293 = vpack.c.b16 %v2268, %v2267
      %v2294 = vpack.c.b16 %v2270, %v2269
      %v2295 = vpack.c.b16 %v2272, %v2271
      %v2296 = vpack.c.b16 %v2274, %v2273
      %v2297 = vpack.c.b16 %v2276, %v2275
      %v2298 = vpack.c.b16 %v2278, %v2277
      %v2299 = vpack.c.b16 %v2280, %v2279
      %v2300 = vpack.c.b16 %v2282, %v2281
      %v2301 = vpack.c.b16 %v2284, %v2283
      %v2302 = vpack.c.b16 %v2286, %v2285
      %2303 = vrot.lane.b32.xlu0 %v2287, 12
      %v2304 = vpop.permute.xlu0 %2303
      %2305 = vrot.lane.b32.xlu0 %v2288, 12
      %v2306 = vpop.permute.xlu0 %2305
      %2307 = vrot.lane.b32.xlu0 %v2289, 12
      %v2308 = vpop.permute.xlu0 %2307
      %2309 = vrot.lane.b32.xlu0 %v2290, 12
      %v2310 = vpop.permute.xlu0 %2309
      %2311 = vrot.lane.b32.xlu0 %v2291, 12
      %v2312 = vpop.permute.xlu0 %2311
      %2313 = vrot.lane.b32.xlu0 %v2292, 12
      %v2314 = vpop.permute.xlu0 %2313
      %2315 = vrot.lane.b32.xlu0 %v2293, 12
      %v2316 = vpop.permute.xlu0 %2315
      %2317 = vrot.lane.b32.xlu0 %v2294, 12
      %v2318 = vpop.permute.xlu0 %2317
      %2319 = vrot.lane.b32.xlu0 %v2295, 12
      %v2320 = vpop.permute.xlu0 %2319
      %2321 = vrot.lane.b32.xlu0 %v2296, 12
      %v2322 = vpop.permute.xlu0 %2321
      %2323 = vrot.lane.b32.xlu0 %v2297, 12
      %v2324 = vpop.permute.xlu0 %2323
      %2325 = vrot.lane.b32.xlu0 %v2298, 12
      %v2326 = vpop.permute.xlu0 %2325
      %2327 = vrot.lane.b32.xlu0 %v2299, 12
      %v2328 = vpop.permute.xlu0 %2327
      %2329 = vrot.lane.b32.xlu0 %v2300, 12
      %v2330 = vpop.permute.xlu0 %2329
      %2331 = vrot.lane.b32.xlu0 %v2301, 12
      %v2332 = vpop.permute.xlu0 %2331
      %2333 = vrot.lane.b32.xlu0 %v2302, 12
      %v2334 = vpop.permute.xlu0 %2333
      %v2335 = vunpack.c.l.b16 %v859
      %v2336 = vunpack.c.l.b16 %v869
      %v2337 = vunpack.c.l.b16 %v883
      %v2338 = vunpack.c.l.b16 %v893
      %v2339 = vunpack.c.l.b16 %v907
      %v2340 = vunpack.c.l.b16 %v917
      %v2341 = vunpack.c.l.b16 %v931
      %v2342 = vunpack.c.l.b16 %v941
      %v2343 = vunpack.c.l.b16 %v955
      %v2344 = vunpack.c.l.b16 %v965
      %v2345 = vunpack.c.l.b16 %v979
      %v2346 = vunpack.c.l.b16 %v989
      %v2347 = vunpack.c.l.b16 %v1003
      %v2348 = vunpack.c.l.b16 %v1013
      %v2349 = vunpack.c.l.b16 %v1027
      %v2350 = vunpack.c.l.b16 %v1037
      %v2351 = vunpack.c.l.b16 %v1051
      %v2352 = vunpack.c.l.b16 %v1061
      %v2353 = vunpack.c.l.b16 %v1075
      %v2354 = vunpack.c.l.b16 %v1085
      %v2355 = vunpack.c.l.b16 %v1099
      %v2356 = vunpack.c.l.b16 %v1109
      %v2357 = vunpack.c.l.b16 %v1123
      %v2358 = vunpack.c.l.b16 %v1133
      %v2359 = vunpack.c.l.b16 %v1147
      %v2360 = vunpack.c.l.b16 %v1157
      %v2361 = vunpack.c.l.b16 %v1171
      %v2362 = vunpack.c.l.b16 %v1181
      %v2363 = vunpack.c.l.b16 %v1195
      %v2364 = vunpack.c.l.b16 %v1205
      %v2365 = vunpack.c.l.b16 %v1219
      %v2366 = vunpack.c.l.b16 %v1229
      %v2367 = vpack.c.b16 %v2336, %v2335
      %v2368 = vpack.c.b16 %v2338, %v2337
      %v2369 = vpack.c.b16 %v2340, %v2339
      %v2370 = vpack.c.b16 %v2342, %v2341
      %v2371 = vpack.c.b16 %v2344, %v2343
      %v2372 = vpack.c.b16 %v2346, %v2345
      %v2373 = vpack.c.b16 %v2348, %v2347
      %v2374 = vpack.c.b16 %v2350, %v2349
      %v2375 = vpack.c.b16 %v2352, %v2351
      %v2376 = vpack.c.b16 %v2354, %v2353
      %v2377 = vpack.c.b16 %v2356, %v2355
      %v2378 = vpack.c.b16 %v2358, %v2357
      %v2379 = vpack.c.b16 %v2360, %v2359
      %v2380 = vpack.c.b16 %v2362, %v2361
      %v2381 = vpack.c.b16 %v2364, %v2363
      %v2382 = vpack.c.b16 %v2366, %v2365
      %2383 = vrot.lane.b32.xlu0 %v2367, 16
      %v2384 = vpop.permute.xlu0 %2383
      %2385 = vrot.lane.b32.xlu0 %v2368, 16
      %v2386 = vpop.permute.xlu0 %2385
      %2387 = vrot.lane.b32.xlu0 %v2369, 16
      %v2388 = vpop.permute.xlu0 %2387
      %2389 = vrot.lane.b32.xlu0 %v2370, 16
      %v2390 = vpop.permute.xlu0 %2389
      %2391 = vrot.lane.b32.xlu0 %v2371, 16
      %v2392 = vpop.permute.xlu0 %2391
      %2393 = vrot.lane.b32.xlu0 %v2372, 16
      %v2394 = vpop.permute.xlu0 %2393
      %2395 = vrot.lane.b32.xlu0 %v2373, 16
      %v2396 = vpop.permute.xlu0 %2395
      %2397 = vrot.lane.b32.xlu0 %v2374, 16
      %v2398 = vpop.permute.xlu0 %2397
      %2399 = vrot.lane.b32.xlu0 %v2375, 16
      %v2400 = vpop.permute.xlu0 %2399
      %2401 = vrot.lane.b32.xlu0 %v2376, 16
      %v2402 = vpop.permute.xlu0 %2401
      %2403 = vrot.lane.b32.xlu0 %v2377, 16
      %v2404 = vpop.permute.xlu0 %2403
      %2405 = vrot.lane.b32.xlu0 %v2378, 16
      %v2406 = vpop.permute.xlu0 %2405
      %2407 = vrot.lane.b32.xlu0 %v2379, 16
      %v2408 = vpop.permute.xlu0 %2407
      %2409 = vrot.lane.b32.xlu0 %v2380, 16
      %v2410 = vpop.permute.xlu0 %2409
      %2411 = vrot.lane.b32.xlu0 %v2381, 16
      %v2412 = vpop.permute.xlu0 %2411
      %2413 = vrot.lane.b32.xlu0 %v2382, 16
      %v2414 = vpop.permute.xlu0 %2413
      %v2415 = vunpack.c.l.b16 %v1297
      %v2416 = vunpack.c.l.b16 %v1300
      %v2417 = vunpack.c.l.b16 %v1304
      %v2418 = vunpack.c.l.b16 %v1307
      %v2419 = vunpack.c.l.b16 %v1311
      %v2420 = vunpack.c.l.b16 %v1314
      %v2421 = vunpack.c.l.b16 %v1318
      %v2422 = vunpack.c.l.b16 %v1321
      %v2423 = vunpack.c.l.b16 %v1325
      %v2424 = vunpack.c.l.b16 %v1328
      %v2425 = vunpack.c.l.b16 %v1332
      %v2426 = vunpack.c.l.b16 %v1335
      %v2427 = vunpack.c.l.b16 %v1339
      %v2428 = vunpack.c.l.b16 %v1342
      %v2429 = vunpack.c.l.b16 %v1346
      %v2430 = vunpack.c.l.b16 %v1349
      %v2431 = vunpack.c.l.b16 %v1353
      %v2432 = vunpack.c.l.b16 %v1356
      %v2433 = vunpack.c.l.b16 %v1360
      %v2434 = vunpack.c.l.b16 %v1363
      %v2435 = vunpack.c.l.b16 %v1367
      %v2436 = vunpack.c.l.b16 %v1370
      %v2437 = vunpack.c.l.b16 %v1374
      %v2438 = vunpack.c.l.b16 %v1377
      %v2439 = vunpack.c.l.b16 %v1381
      %v2440 = vunpack.c.l.b16 %v1384
      %v2441 = vunpack.c.l.b16 %v1388
      %v2442 = vunpack.c.l.b16 %v1391
      %v2443 = vunpack.c.l.b16 %v1395
      %v2444 = vunpack.c.l.b16 %v1398
      %v2445 = vunpack.c.l.b16 %v1402
      %v2446 = vunpack.c.l.b16 %v1405
      %v2447 = vpack.c.b16 %v2416, %v2415
      %v2448 = vpack.c.b16 %v2418, %v2417
      %v2449 = vpack.c.b16 %v2420, %v2419
      %v2450 = vpack.c.b16 %v2422, %v2421
      %v2451 = vpack.c.b16 %v2424, %v2423
      %v2452 = vpack.c.b16 %v2426, %v2425
      %v2453 = vpack.c.b16 %v2428, %v2427
      %v2454 = vpack.c.b16 %v2430, %v2429
      %v2455 = vpack.c.b16 %v2432, %v2431
      %v2456 = vpack.c.b16 %v2434, %v2433
      %v2457 = vpack.c.b16 %v2436, %v2435
      %v2458 = vpack.c.b16 %v2438, %v2437
      %v2459 = vpack.c.b16 %v2440, %v2439
      %v2460 = vpack.c.b16 %v2442, %v2441
      %v2461 = vpack.c.b16 %v2444, %v2443
      %v2462 = vpack.c.b16 %v2446, %v2445
      %2463 = vrot.lane.b32.xlu0 %v2447, 20
      %v2464 = vpop.permute.xlu0 %2463
      %2465 = vrot.lane.b32.xlu0 %v2448, 20
      %v2466 = vpop.permute.xlu0 %2465
      %2467 = vrot.lane.b32.xlu0 %v2449, 20
      %v2468 = vpop.permute.xlu0 %2467
      %2469 = vrot.lane.b32.xlu0 %v2450, 20
      %v2470 = vpop.permute.xlu0 %2469
      %2471 = vrot.lane.b32.xlu0 %v2451, 20
      %v2472 = vpop.permute.xlu0 %2471
      %2473 = vrot.lane.b32.xlu0 %v2452, 20
      %v2474 = vpop.permute.xlu0 %2473
      %2475 = vrot.lane.b32.xlu0 %v2453, 20
      %v2476 = vpop.permute.xlu0 %2475
      %2477 = vrot.lane.b32.xlu0 %v2454, 20
      %v2478 = vpop.permute.xlu0 %2477
      %2479 = vrot.lane.b32.xlu0 %v2455, 20
      %v2480 = vpop.permute.xlu0 %2479
      %2481 = vrot.lane.b32.xlu0 %v2456, 20
      %v2482 = vpop.permute.xlu0 %2481
      %2483 = vrot.lane.b32.xlu0 %v2457, 20
      %v2484 = vpop.permute.xlu0 %2483
      %2485 = vrot.lane.b32.xlu0 %v2458, 20
      %v2486 = vpop.permute.xlu0 %2485
      %2487 = vrot.lane.b32.xlu0 %v2459, 20
      %v2488 = vpop.permute.xlu0 %2487
      %2489 = vrot.lane.b32.xlu0 %v2460, 20
      %v2490 = vpop.permute.xlu0 %2489
      %2491 = vrot.lane.b32.xlu0 %v2461, 20
      %v2492 = vpop.permute.xlu0 %2491
      %2493 = vrot.lane.b32.xlu0 %v2462, 20
      %v2494 = vpop.permute.xlu0 %2493
      %v2511 = vunpack.c.l.b16 %v1407
      %v2512 = vunpack.c.l.b16 %v1408
      %v2513 = vunpack.c.l.b16 %v1409
      %v2514 = vunpack.c.l.b16 %v1410
      %v2515 = vunpack.c.l.b16 %v1411
      %v2516 = vunpack.c.l.b16 %v1412
      %v2517 = vunpack.c.l.b16 %v1413
      %v2518 = vunpack.c.l.b16 %v1414
      %v2519 = vunpack.c.l.b16 %v1415
      %v2520 = vunpack.c.l.b16 %v1416
      %v2521 = vunpack.c.l.b16 %v1417
      %v2522 = vunpack.c.l.b16 %v1418
      %v2523 = vunpack.c.l.b16 %v1419
      %v2524 = vunpack.c.l.b16 %v1420
      %v2525 = vunpack.c.l.b16 %v1421
      %v2526 = vunpack.c.l.b16 %v1422
      %v2527 = vunpack.c.l.b16 %v1423
      %v2528 = vunpack.c.l.b16 %v1424
      %v2529 = vunpack.c.l.b16 %v1425
      %v2530 = vunpack.c.l.b16 %v1426
      %v2531 = vunpack.c.l.b16 %v1427
      %v2532 = vunpack.c.l.b16 %v1428
      %v2533 = vunpack.c.l.b16 %v1429
      %v2534 = vunpack.c.l.b16 %v1430
      %v2535 = vunpack.c.l.b16 %v1431
      %v2536 = vunpack.c.l.b16 %v1432
      %v2537 = vunpack.c.l.b16 %v1433
      %v2538 = vunpack.c.l.b16 %v1434
      %v2539 = vunpack.c.l.b16 %v1435
      %v2540 = vunpack.c.l.b16 %v1436
      %v2541 = vunpack.c.l.b16 %v1437
      %v2542 = vunpack.c.l.b16 %v1438
      %v2543 = vpack.c.b16 %v2512, %v2511
      %v2544 = vpack.c.b16 %v2514, %v2513
      %v2545 = vpack.c.b16 %v2516, %v2515
      %v2546 = vpack.c.b16 %v2518, %v2517
      %v2547 = vpack.c.b16 %v2520, %v2519
      %v2548 = vpack.c.b16 %v2522, %v2521
      %v2549 = vpack.c.b16 %v2524, %v2523
      %v2550 = vpack.c.b16 %v2526, %v2525
      %v2551 = vpack.c.b16 %v2528, %v2527
      %v2552 = vpack.c.b16 %v2530, %v2529
      %v2553 = vpack.c.b16 %v2532, %v2531
      %v2554 = vpack.c.b16 %v2534, %v2533
      %v2555 = vpack.c.b16 %v2536, %v2535
      %v2556 = vpack.c.b16 %v2538, %v2537
      %v2557 = vpack.c.b16 %v2540, %v2539
      %v2558 = vpack.c.b16 %v2542, %v2541
      %2559 = vrot.lane.b32.xlu0 %v2543, 24
      %v2560 = vpop.permute.xlu0 %2559
      %2561 = vrot.lane.b32.xlu0 %v2544, 24
      %v2562 = vpop.permute.xlu0 %2561
      %2563 = vrot.lane.b32.xlu0 %v2545, 24
      %v2564 = vpop.permute.xlu0 %2563
      %2565 = vrot.lane.b32.xlu0 %v2546, 24
      %v2566 = vpop.permute.xlu0 %2565
      %2567 = vrot.lane.b32.xlu0 %v2547, 24
      %v2568 = vpop.permute.xlu0 %2567
      %2569 = vrot.lane.b32.xlu0 %v2548, 24
      %v2570 = vpop.permute.xlu0 %2569
      %2571 = vrot.lane.b32.xlu0 %v2549, 24
      %v2572 = vpop.permute.xlu0 %2571
      %2573 = vrot.lane.b32.xlu0 %v2550, 24
      %v2574 = vpop.permute.xlu0 %2573
      %2575 = vrot.lane.b32.xlu0 %v2551, 24
      %v2576 = vpop.permute.xlu0 %2575
      %2577 = vrot.lane.b32.xlu0 %v2552, 24
      %v2578 = vpop.permute.xlu0 %2577
      %2579 = vrot.lane.b32.xlu0 %v2553, 24
      %v2580 = vpop.permute.xlu0 %2579
      %2581 = vrot.lane.b32.xlu0 %v2554, 24
      %v2582 = vpop.permute.xlu0 %2581
      %2583 = vrot.lane.b32.xlu0 %v2555, 24
      %v2584 = vpop.permute.xlu0 %2583
      %2585 = vrot.lane.b32.xlu0 %v2556, 24
      %v2586 = vpop.permute.xlu0 %2585
      %2587 = vrot.lane.b32.xlu0 %v2557, 24
      %v2588 = vpop.permute.xlu0 %2587
      %2589 = vrot.lane.b32.xlu0 %v2558, 24
      %v2590 = vpop.permute.xlu0 %2589
      %v2591 = vunpack.c.l.b16 %v1468
      %v2592 = vunpack.c.l.b16 %v1478
      %v2593 = vunpack.c.l.b16 %v1492
      %v2594 = vunpack.c.l.b16 %v1502
      %v2595 = vunpack.c.l.b16 %v1516
      %v2596 = vunpack.c.l.b16 %v1526
      %v2597 = vunpack.c.l.b16 %v1540
      %v2598 = vunpack.c.l.b16 %v1550
      %v2599 = vunpack.c.l.b16 %v1564
      %v2600 = vunpack.c.l.b16 %v1574
      %v2601 = vunpack.c.l.b16 %v1588
      %v2602 = vunpack.c.l.b16 %v1598
      %v2603 = vunpack.c.l.b16 %v1612
      %v2604 = vunpack.c.l.b16 %v1622
      %v2605 = vunpack.c.l.b16 %v1636
      %v2606 = vunpack.c.l.b16 %v1646
      %v2607 = vunpack.c.l.b16 %v1660
      %v2608 = vunpack.c.l.b16 %v1670
      %v2609 = vunpack.c.l.b16 %v1684
      %v2610 = vunpack.c.l.b16 %v1694
      %v2611 = vunpack.c.l.b16 %v1708
      %v2612 = vunpack.c.l.b16 %v1718
      %v2613 = vunpack.c.l.b16 %v1732
      %v2614 = vunpack.c.l.b16 %v1742
      %v2615 = vunpack.c.l.b16 %v1756
      %v2616 = vunpack.c.l.b16 %v1766
      %v2617 = vunpack.c.l.b16 %v1780
      %v2618 = vunpack.c.l.b16 %v1790
      %v2619 = vunpack.c.l.b16 %v1804
      %v2620 = vunpack.c.l.b16 %v1814
      %v2621 = vunpack.c.l.b16 %v1828
      %v2622 = vunpack.c.l.b16 %v1838
      %v2623 = vpack.c.b16 %v2592, %v2591
      %v2624 = vpack.c.b16 %v2594, %v2593
      %v2625 = vpack.c.b16 %v2596, %v2595
      %v2626 = vpack.c.b16 %v2598, %v2597
      %v2627 = vpack.c.b16 %v2600, %v2599
      %v2628 = vpack.c.b16 %v2602, %v2601
      %v2629 = vpack.c.b16 %v2604, %v2603
      %v2630 = vpack.c.b16 %v2606, %v2605
      %v2631 = vpack.c.b16 %v2608, %v2607
      %v2632 = vpack.c.b16 %v2610, %v2609
      %v2633 = vpack.c.b16 %v2612, %v2611
      %v2634 = vpack.c.b16 %v2614, %v2613
      %v2635 = vpack.c.b16 %v2616, %v2615
      %v2636 = vpack.c.b16 %v2618, %v2617
      %v2637 = vpack.c.b16 %v2620, %v2619
      %v2638 = vpack.c.b16 %v2622, %v2621
      %2639 = vrot.lane.b32.xlu0 %v2623, 28
      %v2640 = vpop.permute.xlu0 %2639
      %2641 = vrot.lane.b32.xlu0 %v2624, 28
      %v2642 = vpop.permute.xlu0 %2641
      %2643 = vrot.lane.b32.xlu0 %v2625, 28
      %v2644 = vpop.permute.xlu0 %2643
      %2645 = vrot.lane.b32.xlu0 %v2626, 28
      %v2646 = vpop.permute.xlu0 %2645
      %2647 = vrot.lane.b32.xlu0 %v2627, 28
      %v2648 = vpop.permute.xlu0 %2647
      %2649 = vrot.lane.b32.xlu0 %v2628, 28
      %v2650 = vpop.permute.xlu0 %2649
      %2651 = vrot.lane.b32.xlu0 %v2629, 28
      %v2652 = vpop.permute.xlu0 %2651
      %2653 = vrot.lane.b32.xlu0 %v2630, 28
      %v2654 = vpop.permute.xlu0 %2653
      %2655 = vrot.lane.b32.xlu0 %v2631, 28
      %v2656 = vpop.permute.xlu0 %2655
      %2657 = vrot.lane.b32.xlu0 %v2632, 28
      %v2658 = vpop.permute.xlu0 %2657
      %2659 = vrot.lane.b32.xlu0 %v2633, 28
      %v2660 = vpop.permute.xlu0 %2659
      %2661 = vrot.lane.b32.xlu0 %v2634, 28
      %v2662 = vpop.permute.xlu0 %2661
      %2663 = vrot.lane.b32.xlu0 %v2635, 28
      %v2664 = vpop.permute.xlu0 %2663
      %2665 = vrot.lane.b32.xlu0 %v2636, 28
      %v2666 = vpop.permute.xlu0 %2665
      %2667 = vrot.lane.b32.xlu0 %v2637, 28
      %v2668 = vpop.permute.xlu0 %2667
      %2669 = vrot.lane.b32.xlu0 %v2638, 28
      %v2670 = vpop.permute.xlu0 %2669
      %v2671 = vunpack.c.l.b16 %v1906
      %v2672 = vunpack.c.l.b16 %v1909
      %v2673 = vunpack.c.l.b16 %v1913
      %v2674 = vunpack.c.l.b16 %v1916
      %v2675 = vunpack.c.l.b16 %v1920
      %v2676 = vunpack.c.l.b16 %v1923
      %v2677 = vunpack.c.l.b16 %v1927
      %v2678 = vunpack.c.l.b16 %v1930
      %v2679 = vunpack.c.l.b16 %v1934
      %v2680 = vunpack.c.l.b16 %v1937
      %v2681 = vunpack.c.l.b16 %v1941
      %v2682 = vunpack.c.l.b16 %v1944
      %v2683 = vunpack.c.l.b16 %v1948
      %v2684 = vunpack.c.l.b16 %v1951
      %v2685 = vunpack.c.l.b16 %v1955
      %v2686 = vunpack.c.l.b16 %v1958
      %v2687 = vunpack.c.l.b16 %v1962
      %v2688 = vunpack.c.l.b16 %v1965
      %v2689 = vunpack.c.l.b16 %v1969
      %v2690 = vunpack.c.l.b16 %v1972
      %v2691 = vunpack.c.l.b16 %v1976
      %v2692 = vunpack.c.l.b16 %v1979
      %v2693 = vunpack.c.l.b16 %v1983
      %v2694 = vunpack.c.l.b16 %v1986
      %v2695 = vunpack.c.l.b16 %v1990
      %v2696 = vunpack.c.l.b16 %v1993
      %v2697 = vunpack.c.l.b16 %v1997
      %v2698 = vunpack.c.l.b16 %v2000
      %v2699 = vunpack.c.l.b16 %v2004
      %v2700 = vunpack.c.l.b16 %v2007
      %v2701 = vunpack.c.l.b16 %v2011
      %v2702 = vunpack.c.l.b16 %v2014
      %v2703 = vpack.c.b16 %v2672, %v2671
      %v2704 = vpack.c.b16 %v2674, %v2673
      %v2705 = vpack.c.b16 %v2676, %v2675
      %v2706 = vpack.c.b16 %v2678, %v2677
      %v2707 = vpack.c.b16 %v2680, %v2679
      %v2708 = vpack.c.b16 %v2682, %v2681
      %v2709 = vpack.c.b16 %v2684, %v2683
      %v2710 = vpack.c.b16 %v2686, %v2685
      %v2711 = vpack.c.b16 %v2688, %v2687
      %v2712 = vpack.c.b16 %v2690, %v2689
      %v2713 = vpack.c.b16 %v2692, %v2691
      %v2714 = vpack.c.b16 %v2694, %v2693
      %v2715 = vpack.c.b16 %v2696, %v2695
      %v2716 = vpack.c.b16 %v2698, %v2697
      %v2717 = vpack.c.b16 %v2700, %v2699
      %v2718 = vpack.c.b16 %v2702, %v2701
      %2719 = vrot.lane.b32.xlu0 %v2703, 32
      %v2720 = vpop.permute.xlu0 %2719
      %2721 = vrot.lane.b32.xlu0 %v2704, 32
      %v2722 = vpop.permute.xlu0 %2721
      %2723 = vrot.lane.b32.xlu0 %v2705, 32
      %v2724 = vpop.permute.xlu0 %2723
      %2725 = vrot.lane.b32.xlu0 %v2706, 32
      %v2726 = vpop.permute.xlu0 %2725
      %2727 = vrot.lane.b32.xlu0 %v2707, 32
      %v2728 = vpop.permute.xlu0 %2727
      %2729 = vrot.lane.b32.xlu0 %v2708, 32
      %v2730 = vpop.permute.xlu0 %2729
      %2731 = vrot.lane.b32.xlu0 %v2709, 32
      %v2732 = vpop.permute.xlu0 %2731
      %2733 = vrot.lane.b32.xlu0 %v2710, 32
      %v2734 = vpop.permute.xlu0 %2733
      %2735 = vrot.lane.b32.xlu0 %v2711, 32
      %v2736 = vpop.permute.xlu0 %2735
      %2737 = vrot.lane.b32.xlu0 %v2712, 32
      %v2738 = vpop.permute.xlu0 %2737
      %2739 = vrot.lane.b32.xlu0 %v2713, 32
      %v2740 = vpop.permute.xlu0 %2739
      %2741 = vrot.lane.b32.xlu0 %v2714, 32
      %v2742 = vpop.permute.xlu0 %2741
      %2743 = vrot.lane.b32.xlu0 %v2715, 32
      %v2744 = vpop.permute.xlu0 %2743
      %2745 = vrot.lane.b32.xlu0 %v2716, 32
      %v2746 = vpop.permute.xlu0 %2745
      %2747 = vrot.lane.b32.xlu0 %v2717, 32
      %v2748 = vpop.permute.xlu0 %2747
      %2749 = vrot.lane.b32.xlu0 %v2718, 32
      %v2750 = vpop.permute.xlu0 %2749
      %vm2751 = vcmask 31744
      %v2754 = vsel %vm2751, %v2063, %v2128
      %v2757 = vsel %vm2751, %v2064, %v2130
      %v2760 = vsel %vm2751, %v2065, %v2132
      %v2763 = vsel %vm2751, %v2066, %v2134
      %v2766 = vsel %vm2751, %v2067, %v2136
      %v2769 = vsel %vm2751, %v2068, %v2138
      %v2772 = vsel %vm2751, %v2069, %v2140
      %v2775 = vsel %vm2751, %v2070, %v2142
      %v2778 = vsel %vm2751, %v2071, %v2144
      %v2781 = vsel %vm2751, %v2072, %v2146
      %v2784 = vsel %vm2751, %v2073, %v2148
      %v2787 = vsel %vm2751, %v2074, %v2150
      %v2790 = vsel %vm2751, %v2075, %v2152
      %v2793 = vsel %vm2751, %v2076, %v2154
      %v2796 = vsel %vm2751, %v2077, %v2156
      %v2799 = vsel %vm2751, %v2078, %v2158
      %vm2800 = vcmask 64512
      %v2802 = vsel %vm2800, %v2754, %v2208
      %v2804 = vsel %vm2800, %v2757, %v2210
      %v2806 = vsel %vm2800, %v2760, %v2212
      %v2808 = vsel %vm2800, %v2763, %v2214
      %v2810 = vsel %vm2800, %v2766, %v2216
      %v2812 = vsel %vm2800, %v2769, %v2218
      %v2814 = vsel %vm2800, %v2772, %v2220
      %v2816 = vsel %vm2800, %v2775, %v2222
      %v2818 = vsel %vm2800, %v2778, %v2224
      %v2820 = vsel %vm2800, %v2781, %v2226
      %v2822 = vsel %vm2800, %v2784, %v2228
      %v2824 = vsel %vm2800, %v2787, %v2230
      %v2826 = vsel %vm2800, %v2790, %v2232
      %v2828 = vsel %vm2800, %v2793, %v2234
      %v2830 = vsel %vm2800, %v2796, %v2236
      %v2832 = vsel %vm2800, %v2799, %v2238
      %vm2833 = vcmask 97280
      %v2835 = vsel %vm2833, %v2802, %v2304
      %v2837 = vsel %vm2833, %v2804, %v2306
      %v2839 = vsel %vm2833, %v2806, %v2308
      %v2841 = vsel %vm2833, %v2808, %v2310
      %v2843 = vsel %vm2833, %v2810, %v2312
      %v2845 = vsel %vm2833, %v2812, %v2314
      %v2847 = vsel %vm2833, %v2814, %v2316
      %v2849 = vsel %vm2833, %v2816, %v2318
      %v2851 = vsel %vm2833, %v2818, %v2320
      %v2853 = vsel %vm2833, %v2820, %v2322
      %v2855 = vsel %vm2833, %v2822, %v2324
      %v2857 = vsel %vm2833, %v2824, %v2326
      %v2859 = vsel %vm2833, %v2826, %v2328
      %v2861 = vsel %vm2833, %v2828, %v2330
      %v2863 = vsel %vm2833, %v2830, %v2332
      %v2865 = vsel %vm2833, %v2832, %v2334
      %vm2866 = vcmask 130048
      %v2868 = vsel %vm2866, %v2835, %v2384
      %v2870 = vsel %vm2866, %v2837, %v2386
      %v2872 = vsel %vm2866, %v2839, %v2388
      %v2874 = vsel %vm2866, %v2841, %v2390
      %v2876 = vsel %vm2866, %v2843, %v2392
      %v2878 = vsel %vm2866, %v2845, %v2394
      %v2880 = vsel %vm2866, %v2847, %v2396
      %v2882 = vsel %vm2866, %v2849, %v2398
      %v2884 = vsel %vm2866, %v2851, %v2400
      %v2886 = vsel %vm2866, %v2853, %v2402
      %v2888 = vsel %vm2866, %v2855, %v2404
      %v2890 = vsel %vm2866, %v2857, %v2406
      %v2892 = vsel %vm2866, %v2859, %v2408
      %v2894 = vsel %vm2866, %v2861, %v2410
      %v2896 = vsel %vm2866, %v2863, %v2412
      %v2898 = vsel %vm2866, %v2865, %v2414
      %vm2899 = vcmask 162816
      %v2901 = vsel %vm2899, %v2868, %v2464
      %v2903 = vsel %vm2899, %v2870, %v2466
      %v2905 = vsel %vm2899, %v2872, %v2468
      %v2907 = vsel %vm2899, %v2874, %v2470
      %v2909 = vsel %vm2899, %v2876, %v2472
      %v2911 = vsel %vm2899, %v2878, %v2474
      %v2913 = vsel %vm2899, %v2880, %v2476
      %v2915 = vsel %vm2899, %v2882, %v2478
      %v2917 = vsel %vm2899, %v2884, %v2480
      %v2919 = vsel %vm2899, %v2886, %v2482
      %v2921 = vsel %vm2899, %v2888, %v2484
      %v2923 = vsel %vm2899, %v2890, %v2486
      %v2925 = vsel %vm2899, %v2892, %v2488
      %v2927 = vsel %vm2899, %v2894, %v2490
      %v2929 = vsel %vm2899, %v2896, %v2492
      %v2931 = vsel %vm2899, %v2898, %v2494
      %vm2932 = vcmask 195584
      %v2934 = vsel %vm2932, %v2901, %v2560
      %v2936 = vsel %vm2932, %v2903, %v2562
      %v2938 = vsel %vm2932, %v2905, %v2564
      %v2940 = vsel %vm2932, %v2907, %v2566
      %v2942 = vsel %vm2932, %v2909, %v2568
      %v2944 = vsel %vm2932, %v2911, %v2570
      %v2946 = vsel %vm2932, %v2913, %v2572
      %v2948 = vsel %vm2932, %v2915, %v2574
      %v2950 = vsel %vm2932, %v2917, %v2576
      %v2952 = vsel %vm2932, %v2919, %v2578
      %v2954 = vsel %vm2932, %v2921, %v2580
      %v2956 = vsel %vm2932, %v2923, %v2582
      %v2958 = vsel %vm2932, %v2925, %v2584
      %v2960 = vsel %vm2932, %v2927, %v2586
      %v2962 = vsel %vm2932, %v2929, %v2588
      %v2964 = vsel %vm2932, %v2931, %v2590
      %vm2965 = vcmask 228352
      %v2967 = vsel %vm2965, %v2934, %v2640
      %v2969 = vsel %vm2965, %v2936, %v2642
      %v2971 = vsel %vm2965, %v2938, %v2644
      %v2973 = vsel %vm2965, %v2940, %v2646
      %v2975 = vsel %vm2965, %v2942, %v2648
      %v2977 = vsel %vm2965, %v2944, %v2650
      %v2979 = vsel %vm2965, %v2946, %v2652
      %v2981 = vsel %vm2965, %v2948, %v2654
      %v2983 = vsel %vm2965, %v2950, %v2656
      %v2985 = vsel %vm2965, %v2952, %v2658
      %v2987 = vsel %vm2965, %v2954, %v2660
      %v2989 = vsel %vm2965, %v2956, %v2662
      %v2991 = vsel %vm2965, %v2958, %v2664
      %v2993 = vsel %vm2965, %v2960, %v2666
      %v2995 = vsel %vm2965, %v2962, %v2668
      %v2997 = vsel %vm2965, %v2964, %v2670
      %vm2998 = vcmask 261120
      %v3000 = vsel %vm2998, %v2967, %v2720
      %v3002 = vsel %vm2998, %v2969, %v2722
      %v3004 = vsel %vm2998, %v2971, %v2724
      %v3006 = vsel %vm2998, %v2973, %v2726
      %v3008 = vsel %vm2998, %v2975, %v2728
      %v3010 = vsel %vm2998, %v2977, %v2730
      %v3012 = vsel %vm2998, %v2979, %v2732
      %v3014 = vsel %vm2998, %v2981, %v2734
      %v3016 = vsel %vm2998, %v2983, %v2736
      %v3018 = vsel %vm2998, %v2985, %v2738
      %v3020 = vsel %vm2998, %v2987, %v2740
      %v3022 = vsel %vm2998, %v2989, %v2742
      %v3024 = vsel %vm2998, %v2991, %v2744
      %v3026 = vsel %vm2998, %v2993, %v2746
      %v3028 = vsel %vm2998, %v2995, %v2748
      %v3030 = vsel %vm2998, %v2997, %v2750
      %v3031 = vld [vmem:[%s1] sm:$0xf]
      %v3032 = vld [vmem:[%s1 + $0x4] sm:$0xf]
      %v3033 = vld [vmem:[%s1 + $0x8] sm:$0xf]
      %v3034 = vld [vmem:[%s1 + $0xc] sm:$0xf]
      %v3035 = vld [vmem:[%s1 + $0x10] sm:$0x3]
      %v3041 = vunpack.c.l.b16 %v3031
      %v3042 = vunpack.c.l.b16 %v3032
      %v3043 = vunpack.c.l.b16 %v3033
      %v3044 = vunpack.c.l.b16 %v3034
      %v3045 = vunpack.c.l.b16 %v3035
      %v3046 = vpack.c.b16 %v3042, %v3041
      %v3047 = vpack.c.b16 %v3044, %v3043
      %v3048 = vpack.c.b16 %v3045, %v3045
      %vm3051 = vcmask 293888
      %v3052 = vsel %vm3051, %v3000, 0
      %v3054 = vsel %vm3051, %v3002, 0
      %v3056 = vsel %vm3051, %v3004, 0
      %v3058 = vsel %vm3051, %v3006, 0
      %v3060 = vsel %vm3051, %v3008, 0
      %v3062 = vsel %vm3051, %v3010, 0
      %v3064 = vsel %vm3051, %v3012, 0
      %v3066 = vsel %vm3051, %v3014, 0
      %v3068 = vsel %vm3051, %v3016, 0
      %v3070 = vsel %vm3051, %v3018, 0
      %v3072 = vsel %vm3051, %v3020, 0
      %v3074 = vsel %vm3051, %v3022, 0
      %v3076 = vsel %vm3051, %v3024, 0
      %v3078 = vsel %vm3051, %v3026, 0
      %v3080 = vsel %vm3051, %v3028, 0
      %v3082 = vsel %vm3051, %v3030, 0
      %vm3084 = vcmask 1041408
      %v3086 = vsel %vm3084, %v3048, 0
      %3088 = vmatprep.subr.bf16.mxu0 0
      %3089 = vmatpush1.bf16.msra.mxu0 %v3046
      %3090 = vmatprep.subr.bf16.mxu0 0
      %3091 = vmatpush1.bf16.msra.mxu0 %v3047
      %3092 = vmatprep.subr.bf16.mxu0 0
      %3093 = vmatpush1.bf16.msra.mxu0 %v3086
      %3094 = vmatprep.subr.bf16.mxu0 0
      %3095 = vmatpush1.bf16.msra.mxu0 0
      %3096 = vmatprep.subr.bf16.mxu0 0
      %3097 = vmatpush1.bf16.msra.mxu0 0
      %3098 = vmatprep.subr.bf16.mxu0 0
      %3099 = vmatpush1.bf16.msra.mxu0 0
      %3100 = vmatprep.subr.bf16.mxu0 0
      %3101 = vmatpush1.bf16.msra.mxu0 0
      %3102 = vmatprep.subr.bf16.mxu0 0
      %3103 = vmatpush1.bf16.msra.mxu0 0
      %3104 = vmatprep.subr.bf16.mxu0 0
      %3105 = vmatpush1.bf16.msra.mxu0 0
      %3106 = vmatprep.subr.bf16.mxu0 0
      %3107 = vmatpush1.bf16.msra.mxu0 0
      %3108 = vmatprep.subr.bf16.mxu0 0
      %3109 = vmatpush1.bf16.msra.mxu0 0
      %3110 = vmatprep.subr.bf16.mxu0 0
      %3111 = vmatpush1.bf16.msra.mxu0 0
      %3112 = vmatprep.subr.bf16.mxu0 0
      %3113 = vmatpush1.bf16.msra.mxu0 0
      %3114 = vmatprep.subr.bf16.mxu0 0
      %3115 = vmatpush1.bf16.msra.mxu0 0
      %3116 = vmatprep.subr.bf16.mxu0 0
      %3117 = vmatpush1.bf16.msra.mxu0 0
      %3118 = vmatprep.subr.bf16.mxu0 0
      %3119 = vmatpush1.bf16.msra.mxu0 0
      %3120 = vmatprep.mubr.bf16.mxu0 0
      %3121 = vmatmul.mubr.bf16.gmra.mrb[0].mxu0 %v3052
      %v3122 = vpop.f32.mrb[0].mxu0
      %v3123 = vadd.f32 0.0, %v3122
      %v3124 = vpop.f32.mrb[0].mxu0
      %v3125 = vpop.f32.mrb[0].mxu0
      %v3126 = vadd.f32 0.0, %v3125
      %v3127 = vpop.f32.mrb[0].mxu0
      %3128 = vmatprep.mubr.bf16.mxu0 0
      %3129 = vmatmul.mubr.bf16.gmra.mrb[0].mxu0 %v3054
      %v3130 = vpop.f32.mrb[0].mxu0
      %v3131 = vadd.f32 0.0, %v3130
      %v3132 = vpop.f32.mrb[0].mxu0
      %v3133 = vpop.f32.mrb[0].mxu0
      %v3134 = vadd.f32 0.0, %v3133
      %v3135 = vpop.f32.mrb[0].mxu0
      %3136 = vmatprep.mubr.bf16.mxu0 0
      %3137 = vmatmul.mubr.bf16.gmra.mrb[0].mxu0 %v3056
      %v3138 = vpop.f32.mrb[0].mxu0
      %v3139 = vadd.f32 0.0, %v3138
      %v3140 = vpop.f32.mrb[0].mxu0
      %v3141 = vpop.f32.mrb[0].mxu0
      %v3142 = vadd.f32 0.0, %v3141
      %v3143 = vpop.f32.mrb[0].mxu0
      %3144 = vmatprep.mubr.bf16.mxu0 0
      %3145 = vmatmul.mubr.bf16.gmra.mrb[0].mxu0 %v3058
      %v3146 = vpop.f32.mrb[0].mxu0
      %v3147 = vadd.f32 0.0, %v3146
      %v3148 = vpop.f32.mrb[0].mxu0
      %v3149 = vpop.f32.mrb[0].mxu0
      %v3150 = vadd.f32 0.0, %v3149
      %v3151 = vpop.f32.mrb[0].mxu0
      %3152 = vmatprep.mubr.bf16.mxu0 0
      %3153 = vmatmul.mubr.bf16.gmra.mrb[0].mxu0 %v3060
      %v3154 = vpop.f32.mrb[0].mxu0
      %v3155 = vadd.f32 0.0, %v3154
      %v3156 = vpop.f32.mrb[0].mxu0
      %v3157 = vpop.f32.mrb[0].mxu0
      %v3158 = vadd.f32 0.0, %v3157
      %v3159 = vpop.f32.mrb[0].mxu0
      %3160 = vmatprep.mubr.bf16.mxu0 0
      %3161 = vmatmul.mubr.bf16.gmra.mrb[0].mxu0 %v3062
      %v3162 = vpop.f32.mrb[0].mxu0
      %v3163 = vadd.f32 0.0, %v3162
      %v3164 = vpop.f32.mrb[0].mxu0
      %v3165 = vpop.f32.mrb[0].mxu0
      %v3166 = vadd.f32 0.0, %v3165
      %v3167 = vpop.f32.mrb[0].mxu0
      %3168 = vmatprep.mubr.bf16.mxu0 0
      %3169 = vmatmul.mubr.bf16.gmra.mrb[0].mxu0 %v3064
      %v3170 = vpop.f32.mrb[0].mxu0
      %v3171 = vadd.f32 0.0, %v3170
      %v3172 = vpop.f32.mrb[0].mxu0
      %v3173 = vpop.f32.mrb[0].mxu0
      %v3174 = vadd.f32 0.0, %v3173
      %v3175 = vpop.f32.mrb[0].mxu0
      %3176 = vmatprep.mubr.bf16.mxu0 0
      %3177 = vmatmul.mubr.bf16.gmra.mrb[0].mxu0 %v3066
      %v3178 = vpop.f32.mrb[0].mxu0
      %v3179 = vadd.f32 0.0, %v3178
      %v3180 = vpop.f32.mrb[0].mxu0
      %v3181 = vpop.f32.mrb[0].mxu0
      %v3182 = vadd.f32 0.0, %v3181
      %v3183 = vpop.f32.mrb[0].mxu0
      %3184 = vmatprep.mubr.bf16.mxu0 0
      %3185 = vmatmul.mubr.bf16.gmra.mrb[0].mxu0 %v3068
      %v3186 = vpop.f32.mrb[0].mxu0
      %v3187 = vadd.f32 0.0, %v3186
      %v3188 = vpop.f32.mrb[0].mxu0
      %v3189 = vpop.f32.mrb[0].mxu0
      %v3190 = vadd.f32 0.0, %v3189
      %v3191 = vpop.f32.mrb[0].mxu0
      %3192 = vmatprep.mubr.bf16.mxu0 0
      %3193 = vmatmul.mubr.bf16.gmra.mrb[0].mxu0 %v3070
      %v3194 = vpop.f32.mrb[0].mxu0
      %v3195 = vadd.f32 0.0, %v3194
      %v3196 = vpop.f32.mrb[0].mxu0
      %v3197 = vpop.f32.mrb[0].mxu0
      %v3198 = vadd.f32 0.0, %v3197
      %v3199 = vpop.f32.mrb[0].mxu0
      %3200 = vmatprep.mubr.bf16.mxu0 0
      %3201 = vmatmul.mubr.bf16.gmra.mrb[0].mxu0 %v3072
      %v3202 = vpop.f32.mrb[0].mxu0
      %v3203 = vadd.f32 0.0, %v3202
      %v3204 = vpop.f32.mrb[0].mxu0
      %v3205 = vpop.f32.mrb[0].mxu0
      %v3206 = vadd.f32 0.0, %v3205
      %v3207 = vpop.f32.mrb[0].mxu0
      %3208 = vmatprep.mubr.bf16.mxu0 0
      %3209 = vmatmul.mubr.bf16.gmra.mrb[0].mxu0 %v3074
      %v3210 = vpop.f32.mrb[0].mxu0
      %v3211 = vadd.f32 0.0, %v3210
      %v3212 = vpop.f32.mrb[0].mxu0
      %v3213 = vpop.f32.mrb[0].mxu0
      %v3214 = vadd.f32 0.0, %v3213
      %v3215 = vpop.f32.mrb[0].mxu0
      %3216 = vmatprep.mubr.bf16.mxu0 0
      %3217 = vmatmul.mubr.bf16.gmra.mrb[0].mxu0 %v3076
      %v3218 = vpop.f32.mrb[0].mxu0
      %v3219 = vadd.f32 0.0, %v3218
      %v3220 = vpop.f32.mrb[0].mxu0
      %v3221 = vpop.f32.mrb[0].mxu0
      %v3222 = vadd.f32 0.0, %v3221
      %v3223 = vpop.f32.mrb[0].mxu0
      %3224 = vmatprep.mubr.bf16.mxu0 0
      %3225 = vmatmul.mubr.bf16.gmra.mrb[0].mxu0 %v3078
      %v3226 = vpop.f32.mrb[0].mxu0
      %v3227 = vadd.f32 0.0, %v3226
      %v3228 = vpop.f32.mrb[0].mxu0
      %v3229 = vpop.f32.mrb[0].mxu0
      %v3230 = vadd.f32 0.0, %v3229
      %v3231 = vpop.f32.mrb[0].mxu0
      %3232 = vmatprep.mubr.bf16.mxu0 0
      %3233 = vmatmul.mubr.bf16.gmra.mrb[0].mxu0 %v3080
      %v3234 = vpop.f32.mrb[0].mxu0
      %v3235 = vadd.f32 0.0, %v3234
      %v3236 = vpop.f32.mrb[0].mxu0
      %v3237 = vpop.f32.mrb[0].mxu0
      %v3238 = vadd.f32 0.0, %v3237
      %v3239 = vpop.f32.mrb[0].mxu0
      %3240 = vmatprep.mubr.bf16.mxu0 0
      %3241 = vmatmul.mubr.bf16.gmra.mrb[0].mxu0 %v3082
      %v3242 = vpop.f32.mrb[0].mxu0
      %v3243 = vadd.f32 0.0, %v3242
      %v3244 = vpop.f32.mrb[0].mxu0
      %v3245 = vpop.f32.mrb[0].mxu0
      %v3246 = vadd.f32 0.0, %v3245
      %v3247 = vpop.f32.mrb[0].mxu0
      %3248 = vdwg.mxu0
      %v3249 = vadd.f32 %v3123, %v3126
      %v3250 = vadd.f32 %v3249, %v3131
      %v3251 = vadd.f32 %v3250, %v3134
      %v3252 = vadd.f32 %v3251, %v3139
      %v3253 = vadd.f32 %v3252, %v3142
      %v3254 = vadd.f32 %v3253, %v3147
      %v3255 = vadd.f32 %v3254, %v3150
      %v3256 = vadd.f32 %v3255, %v3155
      %v3257 = vadd.f32 %v3256, %v3158
      %v3258 = vadd.f32 %v3257, %v3163
      %v3259 = vadd.f32 %v3258, %v3166
      %v3260 = vadd.f32 %v3259, %v3171
      %v3261 = vadd.f32 %v3260, %v3174
      %v3262 = vadd.f32 %v3261, %v3179
      %v3263 = vadd.f32 %v3262, %v3182
      %v3264 = vadd.f32 %v3263, %v3187
      %v3265 = vadd.f32 %v3264, %v3190
      %v3266 = vadd.f32 %v3265, %v3195
      %v3267 = vadd.f32 %v3266, %v3198
      %v3268 = vadd.f32 %v3267, %v3203
      %v3269 = vadd.f32 %v3268, %v3206
      %v3270 = vadd.f32 %v3269, %v3211
      %v3271 = vadd.f32 %v3270, %v3214
      %v3272 = vadd.f32 %v3271, %v3219
      %v3273 = vadd.f32 %v3272, %v3222
      %v3274 = vadd.f32 %v3273, %v3227
      %v3275 = vadd.f32 %v3274, %v3230
      %v3276 = vadd.f32 %v3275, %v3235
      %v3277 = vadd.f32 %v3276, %v3238
      %v3278 = vadd.f32 %v3277, %v3243
      %v3279 = vadd.f32 %v3278, %v3246
      %v3280 = vrot.slane %v3279, 4
      %v3281 = vadd.f32 %v3279, %v3280
      %v3282 = vrot.slane %v3281, 2
      %v3283 = vadd.f32 %v3281, %v3282
      %v3284 = vrot.slane %v3283, 1
      %v3285 = vadd.f32 %v3283, %v3284
      %3286 = vst [vmem:[%s181] sm:$0x1] %v3285
      %v3287 = vmul.f32 %v3123, %v3123
      %v3288 = vmul.f32 %v3126, %v3126
      %v3289 = vmul.f32 %v3131, %v3131
      %v3290 = vmul.f32 %v3134, %v3134
      %v3291 = vmul.f32 %v3139, %v3139
      %v3292 = vmul.f32 %v3142, %v3142
      %v3293 = vmul.f32 %v3147, %v3147
      %v3294 = vmul.f32 %v3150, %v3150
      %v3295 = vmul.f32 %v3155, %v3155
      %v3296 = vmul.f32 %v3158, %v3158
      %v3297 = vmul.f32 %v3163, %v3163
      %v3298 = vmul.f32 %v3166, %v3166
      %v3299 = vmul.f32 %v3171, %v3171
      %v3300 = vmul.f32 %v3174, %v3174
      %v3301 = vmul.f32 %v3179, %v3179
      %v3302 = vmul.f32 %v3182, %v3182
      %v3303 = vmul.f32 %v3187, %v3187
      %v3304 = vmul.f32 %v3190, %v3190
      %v3305 = vmul.f32 %v3195, %v3195
      %v3306 = vmul.f32 %v3198, %v3198
      %v3307 = vmul.f32 %v3203, %v3203
      %v3308 = vmul.f32 %v3206, %v3206
      %v3309 = vmul.f32 %v3211, %v3211
      %v3310 = vmul.f32 %v3214, %v3214
      %v3311 = vmul.f32 %v3219, %v3219
      %v3312 = vmul.f32 %v3222, %v3222
      %v3313 = vmul.f32 %v3227, %v3227
      %v3314 = vmul.f32 %v3230, %v3230
      %v3315 = vmul.f32 %v3235, %v3235
      %v3316 = vmul.f32 %v3238, %v3238
      %v3317 = vmul.f32 %v3243, %v3243
      %v3318 = vmul.f32 %v3246, %v3246
      %v3319 = vadd.f32 %v3287, %v3288
      %v3320 = vadd.f32 %v3319, %v3289
      %v3321 = vadd.f32 %v3320, %v3290
      %v3322 = vadd.f32 %v3321, %v3291
      %v3323 = vadd.f32 %v3322, %v3292
      %v3324 = vadd.f32 %v3323, %v3293
      %v3325 = vadd.f32 %v3324, %v3294
      %v3326 = vadd.f32 %v3325, %v3295
      %v3327 = vadd.f32 %v3326, %v3296
      %v3328 = vadd.f32 %v3327, %v3297
      %v3329 = vadd.f32 %v3328, %v3298
      %v3330 = vadd.f32 %v3329, %v3299
      %v3331 = vadd.f32 %v3330, %v3300
      %v3332 = vadd.f32 %v3331, %v3301
      %v3333 = vadd.f32 %v3332, %v3302
      %v3334 = vadd.f32 %v3333, %v3303
      %v3335 = vadd.f32 %v3334, %v3304
      %v3336 = vadd.f32 %v3335, %v3305
      %v3337 = vadd.f32 %v3336, %v3306
      %v3338 = vadd.f32 %v3337, %v3307
      %v3339 = vadd.f32 %v3338, %v3308
      %v3340 = vadd.f32 %v3339, %v3309
      %v3341 = vadd.f32 %v3340, %v3310
      %v3342 = vadd.f32 %v3341, %v3311
      %v3343 = vadd.f32 %v3342, %v3312
      %v3344 = vadd.f32 %v3343, %v3313
      %v3345 = vadd.f32 %v3344, %v3314
      %v3346 = vadd.f32 %v3345, %v3315
      %v3347 = vadd.f32 %v3346, %v3316
      %v3348 = vadd.f32 %v3347, %v3317
      %v3349 = vadd.f32 %v3348, %v3318
      %v3350 = vrot.slane %v3349, 4
      %v3351 = vadd.f32 %v3349, %v3350
      %v3352 = vrot.slane %v3351, 2
      %v3353 = vadd.f32 %v3351, %v3352
      %v3354 = vrot.slane %v3353, 1
      %v3355 = vadd.f32 %v3353, %v3354
      %3356 = vst [vmem:[%s181 + $0x1] sm:$0x1] %v3355
      %3357 = vxpose.xlu0.b32.start [1/16] %v3123, 128
      %3358 = vxpose.xlu0.b32.cont [2/16] %v3126, 128
      %3359 = vxpose.xlu0.b32.cont [3/16] %v3131, 128
      %3360 = vxpose.xlu0.b32.cont [4/16] %v3134, 128
      %3361 = vxpose.xlu0.b32.cont [5/16] %v3139, 128
      %3362 = vxpose.xlu0.b32.cont [6/16] %v3142, 128
      %3363 = vxpose.xlu0.b32.cont [7/16] %v3147, 128
      %3364 = vxpose.xlu0.b32.cont [8/16] %v3150, 128
      %3365 = vxpose.xlu0.b32.cont [9/16] %v3155, 128
      %3366 = vxpose.xlu0.b32.cont [10/16] %v3158, 128
      %3367 = vxpose.xlu0.b32.cont [11/16] %v3163, 128
      %3368 = vxpose.xlu0.b32.cont [12/16] %v3166, 128
      %3369 = vxpose.xlu0.b32.cont [13/16] %v3171, 128
      %3370 = vxpose.xlu0.b32.cont [14/16] %v3174, 128
      %3371 = vxpose.xlu0.b32.cont [15/16] %v3179, 128
      %3372 = vxpose.xlu0.b32.end [16/16] %v3182, 128
      %v3373 = vpop.trf.xlu0
      %v3374 = vpop.trf.xlu0
      %v3375 = vpop.trf.xlu0
      %v3376 = vpop.trf.xlu0
      %v3377 = vpop.trf.xlu0
      %v3378 = vpop.trf.xlu0
      %v3379 = vpop.trf.xlu0
      %v3380 = vpop.trf.xlu0
      %v3381 = vpop.trf.xlu0
      %v3382 = vpop.trf.xlu0
      %v3383 = vpop.trf.xlu0
      %v3384 = vpop.trf.xlu0
      %v3385 = vpop.trf.xlu0
      %v3386 = vpop.trf.xlu0
      %v3387 = vpop.trf.xlu0
      %v3388 = vpop.trf.xlu0
      %3389 = vxpose.xlu0.b32.start [1/16] %v3187, 128
      %3390 = vxpose.xlu0.b32.cont [2/16] %v3190, 128
      %3391 = vxpose.xlu0.b32.cont [3/16] %v3195, 128
      %3392 = vxpose.xlu0.b32.cont [4/16] %v3198, 128
      %3393 = vxpose.xlu0.b32.cont [5/16] %v3203, 128
      %3394 = vxpose.xlu0.b32.cont [6/16] %v3206, 128
      %3395 = vxpose.xlu0.b32.cont [7/16] %v3211, 128
      %3396 = vxpose.xlu0.b32.cont [8/16] %v3214, 128
      %3397 = vxpose.xlu0.b32.cont [9/16] %v3219, 128
      %3398 = vxpose.xlu0.b32.cont [10/16] %v3222, 128
      %3399 = vxpose.xlu0.b32.cont [11/16] %v3227, 128
      %3400 = vxpose.xlu0.b32.cont [12/16] %v3230, 128
      %3401 = vxpose.xlu0.b32.cont [13/16] %v3235, 128
      %3402 = vxpose.xlu0.b32.cont [14/16] %v3238, 128
      %3403 = vxpose.xlu0.b32.cont [15/16] %v3243, 128
      %3404 = vxpose.xlu0.b32.end [16/16] %v3246, 128
      %v3405 = vpop.trf.xlu0
      %v3406 = vpop.trf.xlu0
      %v3407 = vpop.trf.xlu0
      %v3408 = vpop.trf.xlu0
      %v3409 = vpop.trf.xlu0
      %v3410 = vpop.trf.xlu0
      %v3411 = vpop.trf.xlu0
      %v3412 = vpop.trf.xlu0
      %v3413 = vpop.trf.xlu0
      %v3414 = vpop.trf.xlu0
      %v3415 = vpop.trf.xlu0
      %v3416 = vpop.trf.xlu0
      %v3417 = vpop.trf.xlu0
      %v3418 = vpop.trf.xlu0
      %v3419 = vpop.trf.xlu0
      %v3420 = vpop.trf.xlu0
      %v3421 = vpack.c.bf16 %v3373, %v3373
      %v3422 = vpack.c.bf16 %v3405, %v3405
      %v3425 = vunpack.c.l.b16 %v3421
      %v3426 = vunpack.c.l.b16 %v3422
      %v3427 = vpack.c.b16 %v3426, %v3425
      %3429 = vst [vmem:[%s177] sm:$0xff] %v3427
      %p3430 = scmp.lt.s32.totalorder %s15, 1
      %s3431 = scalar_select %p3430, %s15, 1
      %s3432 = smul.addr %s3431, 2
      %s3433 = smul.addr %s3432, 4
      %s3434 = scalar_lea.vmem %s2, %s3433
      %p3435 = scmp.lt.s32.totalorder %s15, 1
      %s3436 = scalar_select %p3435, %s15, 1
      %s3437 = smul.addr %s3436, 2
      %s3438 = scalar_lea.vmem %s3, %s3437
      // Predicated region
      $region29: #{basic_conv_forward.2} parent=27 // pred_check
        %p3439 = pneg %p80
      $region30: #{basic_conv_forward.2} parent=27 // pred_check_branch
        %3441 = sbr.rel (%p3439) target = $region32
      $region31: #{basic_conv_forward.2} parent=27 // pred_region
        _
      $region32: #{basic_conv_forward.2} parent=27 // pred_fallthru
        _
      // Predicated region
      $region33: #{basic_conv_forward.2} parent=27 // pred_check
        %p3442 = pneg %p106
      $region34: #{basic_conv_forward.2} parent=27 // pred_check_branch
        %3444 = sbr.rel (%p3442) target = $region36
      $region35: #{basic_conv_forward.2} parent=27 // pred_region
        _
      $region36: #{basic_conv_forward.2} parent=27 // pred_fallthru
        _
    $region28: #{basic_conv_forward.2} parent=5 // pred_fallthru
      _
    %p3445 = scmp.le.s32.totalorder 2, %s10
    // Predicated region
    $region37: #{basic_conv_forward.2} parent=5 // pred_check
      %p3446 = pneg %p3445
    $region38: #{basic_conv_forward.2} parent=5 // pred_check_branch
      %3448 = sbr.rel (%p3446) target = $region40
    $region39: #{basic_conv_forward.2} parent=5 // pred_region
      %s3449 = ssub.s32 %s10, 2
      // Predicated region
      $region41: #{basic_conv_forward.2} parent=39 // pred_check
        %p3450 = pneg %p86
      $region42: #{basic_conv_forward.2} parent=39 // pred_check_branch
        %3452 = sbr.rel (%p3450) target = $region44
      $region43: #{basic_conv_forward.2} parent=39 // pred_region
        %p3453 = scmp.lt.s32.totalorder %s16, 1
        %s3454 = scalar_select %p3453, %s16, 1
        %s3455 = smul.addr %s3454, 2
        %s3456 = smul.addr %s3455, 4
        %s3457 = scalar_lea.vmem %s2, %s3456
      $region44: #{basic_conv_forward.2} parent=39 // pred_fallthru
        _
      // Predicated region
      $region45: #{basic_conv_forward.2} parent=39 // pred_check
        %p3458 = pneg %p112
      $region46: #{basic_conv_forward.2} parent=39 // pred_check_branch
        %3460 = sbr.rel (%p3458) target = $region48
      $region47: #{basic_conv_forward.2} parent=39 // pred_region
        %p3461 = scmp.lt.s32.totalorder %s16, 1
        %s3462 = scalar_select %p3461, %s16, 1
        %s3463 = smul.addr %s3462, 2
        %s3464 = scalar_lea.vmem %s3, %s3463
      $region48: #{basic_conv_forward.2} parent=39 // pred_fallthru
        _
    $region40: #{basic_conv_forward.2} parent=5 // pred_fallthru
      _
  $region6: #{basic_conv_forward.2} parent=0 // loop_footer
    %s14 = sadd.s32 1, %s10
  $region7: #{basic_conv_forward.2} parent=0 // loop_footer_branch
    %9 = sbr.rel target = $region3
  $region8: #{basic_conv_forward.2} parent=0 // loop_exit
    _

</llo_original>
